<compile_context>
chip_gen: v7x
topology: tpu7x:2x2x1
jax: 0.10.0
libtpu: 0.0.40
codegen_flags: <defaults>
</compile_context>

<pallas_src>
import functools
import math

import jax
import jax.numpy as jnp
import numpy as np
from jax.experimental import pallas as pl
from jax.experimental.pallas import tpu as pltpu

# ---- module hyper-parameters (from the PyTorch spec) -----------------------
D_MODEL = 256
MAX_LEN = 100
NHEAD = 4
DIM_FF = 1024
LN_EPS = 1e-5
BN_EPS = 1e-5

ATTRIBUTION_IDS = np.array([5] * 9 + [4] * 6 + [3] * 16 + [2] * 8 + [1] * 6 + [0] * 10,
                           dtype=np.float32)
FEAT_LEN = int(ATTRIBUTION_IDS.shape[0])          # 55


# ---------------------------------------------------------------------------
# small shared math helpers (used identically inside kernels and reference)
# ---------------------------------------------------------------------------
def _gelu_tanh(x):
    # TODO(synk): PyTorch uses exact erf-GELU; tanh approximation (max abs err ~1e-3)
    # is used so the kernel only needs guaranteed Mosaic transcendentals (tanh).
    c = math.sqrt(2.0 / math.pi)
    return 0.5 * x * (1.0 + jnp.tanh(c * (x + 0.044715 * x * x * x)))


def _layer_norm(x, w, b):
    m = jnp.mean(x, axis=-1, keepdims=True)
    xc = x - m
    var = jnp.mean(xc * xc, axis=-1, keepdims=True)
    return xc * jax.lax.rsqrt(var + LN_EPS) * w + b


def _softplus(x):
    # numerically-stable softplus, matches torch.nn.functional.softplus
    return jnp.maximum(x, 0.0) + jnp.log(1.0 + jnp.exp(-jnp.abs(x)))


# ---------------------------------------------------------------------------
# 1) positional-encoding table kernel (built once, cached in params)
# ---------------------------------------------------------------------------
def _pe_kernel(div_ref, o_ref):
    S, D = o_ref.shape
    pos = jax.lax.broadcasted_iota(jnp.int32, (S, 1), 0).astype(jnp.float32)   # (S,1)
    col = jax.lax.broadcasted_iota(jnp.int32, (1, D), 1)                       # (1,D)
    # odd columns: cos(w*pos) == sin(w*pos + pi/2)  -> single sin, no where(sin,cos)
    phase = jnp.where(col % 2 == 1, jnp.float32(math.pi / 2.0), jnp.float32(0.0))
    angle = pos * div_ref[...] + phase                                         # (S,D)
    o_ref[...] = jnp.sin(angle)


def _build_pe_table(d_model: int, max_len: int) -> jax.Array:
    padded = ((max_len + 7) // 8) * 8                 # (8,128)-aligned output slab
    half_idx = np.arange(0, d_model, 2, dtype=np.float32)
    div_half = np.exp(half_idx * (-math.log(10000.0) / d_model))
    div_full = np.repeat(div_half, 2)[None, :].astype(np.float32)   # (1, d_model)
    pe = pl.pallas_call(
        _pe_kernel,
        out_shape=jax.ShapeDtypeStruct((padded, d_model), jnp.float32),
    )(jnp.asarray(div_full))
    return pe[:max_len]


# ---------------------------------------------------------------------------
# 2) embedding kernel: src*w_feat + (pe + attribution_ids)   -> (B, F, D)
# ---------------------------------------------------------------------------
def _embed_kernel(src_ref, w_ref, bias_ref, o_ref):
    # src_ref: (1,F,1)  w_ref: (1,D)  bias_ref: (F,D)  o_ref: (1,F,D)
    o_ref[0] = src_ref[0] * w_ref[...] + bias_ref[...]


def _embed(src, feat_w, bias):
    B, F = src.shape
    D = feat_w.shape[1]
    return pl.pallas_call(
        _embed_kernel,
        out_shape=jax.ShapeDtypeStruct((B, F, D), jnp.float32),
        grid=(B,),
        in_specs=[
            pl.BlockSpec((1, F, 1), lambda b: (b, 0, 0)),
            pl.BlockSpec((1, D), lambda b: (0, 0)),
            pl.BlockSpec((F, D), lambda b: (0, 0)),
        ],
        out_specs=pl.BlockSpec((1, F, D), lambda b: (b, 0, 0)),
        compiler_params=pltpu.CompilerParams(dimension_semantics=("parallel",)),
    )(src[:, :, None], feat_w, bias)


# ---------------------------------------------------------------------------
# 3) multi-head attention block: LN(x_q + MHA(x_q, x_kv))
# ---------------------------------------------------------------------------
def _mha_ln_kernel(xq_ref, xkv_ref, wq_ref, bq_ref, wk_ref, bk_ref, wv_ref, bv_ref,
                   wo_ref, bo_ref, lnw_ref, lnb_ref, o_ref, *, nhead):
    xq = xq_ref[0]                       # (F, D)
    xkv = xkv_ref[0]                     # (F, D)
    q = jnp.dot(xq, wq_ref[...], preferred_element_type=jnp.float32) + bq_ref[...]
    k = jnp.dot(xkv, wk_ref[...], preferred_element_type=jnp.float32) + bk_ref[...]
    v = jnp.dot(xkv, wv_ref[...], preferred_element_type=jnp.float32) + bv_ref[...]
    F_, D = q.shape
    hd = D // nhead
    scale = 1.0 / math.sqrt(hd)

    attn = jnp.zeros((F_, D), jnp.float32)
    for h in range(nhead):               # static unroll, nhead=4
        lo, hi = h * hd, (h + 1) * hd
        qh = q[:, lo:hi]
        kh = k[:, lo:hi]
        vh = v[:, lo:hi]
        s = jax.lax.dot_general(qh, kh, (((1,), (1,)), ((), ())),
                                preferred_element_type=jnp.float32) * scale    # (F,F)
        s = s - jnp.max(s, axis=-1, keepdims=True)
        e = jnp.exp(s)
        p = e / jnp.sum(e, axis=-1, keepdims=True)
        ctx = jnp.dot(p, vh, preferred_element_type=jnp.float32)               # (F,hd)
        attn = attn + jnp.dot(ctx, wo_ref[lo:hi, :],
                              preferred_element_type=jnp.float32)
    attn = attn + bo_ref[...]
    o_ref[0] = _layer_norm(xq + attn, lnw_ref[...], lnb_ref[...])


def _mha_block(x_q, x_kv, p, nhead):
    B, F, D = x_q.shape
    spec_x = pl.BlockSpec((1, F, D), lambda b: (b, 0, 0))
    spec_mat = pl.BlockSpec((D, D), lambda b: (0, 0))
    spec_vec = pl.BlockSpec((1, D), lambda b: (0, 0))
    return pl.pallas_call(
        functools.partial(_mha_ln_kernel, nhead=nhead),
        out_shape=jax.ShapeDtypeStruct((B, F, D), jnp.float32),
        grid=(B,),
        in_specs=[spec_x, spec_x,
                  spec_mat, spec_vec, spec_mat, spec_vec, spec_mat, spec_vec,
                  spec_mat, spec_vec, spec_vec, spec_vec],
        out_specs=spec_x,
        compiler_params=pltpu.CompilerParams(dimension_semantics=("parallel",)),
    )(x_q, x_kv, p["wq"], p["bq"], p["wk"], p["bk"], p["wv"], p["bv"],
      p["wo"], p["bo"], p["ln_w"], p["ln_b"])


# ---------------------------------------------------------------------------
# 4) feed-forward block: LN(x + W2 gelu(W1 x + b1) + b2)
# ---------------------------------------------------------------------------
def _ffn_ln_kernel(x_ref, w1_ref, b1_ref, w2_ref, b2_ref, lnw_ref, lnb_ref, o_ref):
    x = x_ref[0]                                                            # (F, D)
    h = jnp.dot(x, w1_ref[...], preferred_element_type=jnp.float32) + b1_ref[...]
    h = _gelu_tanh(h)
    y = jnp.dot(h, w2_ref[...], preferred_element_type=jnp.float32) + b2_ref[...]
    o_ref[0] = _layer_norm(x + y, lnw_ref[...], lnb_ref[...])


def _ffn_block(x, p):
    B, F, D = x.shape
    DFF = p["w1"].shape[1]
    spec_x = pl.BlockSpec((1, F, D), lambda b: (b, 0, 0))
    return pl.pallas_call(
        _ffn_ln_kernel,
        out_shape=jax.ShapeDtypeStruct((B, F, D), jnp.float32),
        grid=(B,),
        in_specs=[spec_x,
                  pl.BlockSpec((D, DFF), lambda b: (0, 0)),
                  pl.BlockSpec((1, DFF), lambda b: (0, 0)),
                  pl.BlockSpec((DFF, D), lambda b: (0, 0)),
                  pl.BlockSpec((1, D), lambda b: (0, 0)),
                  pl.BlockSpec((1, D), lambda b: (0, 0)),
                  pl.BlockSpec((1, D), lambda b: (0, 0))],
        out_specs=spec_x,
        compiler_params=pltpu.CompilerParams(dimension_semantics=("parallel",)),
    )(x, p["w1"], p["b1"], p["w2"], p["b2"], p["ln_w"], p["ln_b"])


# ---------------------------------------------------------------------------
# 5) encoder head: mean over seq -> fc_mu, fc_logvar
# ---------------------------------------------------------------------------
def _enc_head_kernel(x_ref, wmu_ref, bmu_ref, wlv_ref, blv_ref, mu_ref, lv_ref):
    pooled = jnp.mean(x_ref[0], axis=0, keepdims=True)                      # (1, D)
    mu_ref[...] = jnp.dot(pooled, wmu_ref[...],
                          preferred_element_type=jnp.float32) + bmu_ref[...]
    lv_ref[...] = jnp.dot(pooled, wlv_ref[...],
                          preferred_element_type=jnp.float32) + blv_ref[...]


def _enc_head(x, p):
    B, F, D = x.shape
    return pl.pallas_call(
        _enc_head_kernel,
        out_shape=(jax.ShapeDtypeStruct((B, D), jnp.float32),
                   jax.ShapeDtypeStruct((B, D), jnp.float32)),
        grid=(B,),
        in_specs=[pl.BlockSpec((1, F, D), lambda b: (b, 0, 0)),
                  pl.BlockSpec((D, D), lambda b: (0, 0)),
                  pl.BlockSpec((1, D), lambda b: (0, 0)),
                  pl.BlockSpec((D, D), lambda b: (0, 0)),
                  pl.BlockSpec((1, D), lambda b: (0, 0))],
        out_specs=(pl.BlockSpec((1, D), lambda b: (b, 0)),
                   pl.BlockSpec((1, D), lambda b: (b, 0))),
        compiler_params=pltpu.CompilerParams(dimension_semantics=("parallel",)),
    )(x, p["w_mu"], p["b_mu"], p["w_lv"], p["b_lv"])


# ---------------------------------------------------------------------------
# 6) decoder head: BatchNorm1d(eval affine) -> softplus -> Linear(d_model, 1)
# ---------------------------------------------------------------------------
def _dec_head_kernel(x_ref, bn_scale_ref, bn_shift_ref, wout_ref, bout_ref, o_ref):
    x = x_ref[0]                                                            # (F, D)
    y = x * bn_scale_ref[...] + bn_shift_ref[...]                           # per-channel affine
    sp = _softplus(y)
    o_ref[0] = jnp.dot(sp, wout_ref[...],
                       preferred_element_type=jnp.float32) + bout_ref[...]  # (F, 1)


def _dec_head(x, p):
    B, F, D = x.shape
    out = pl.pallas_call(
        _dec_head_kernel,
        out_shape=jax.ShapeDtypeStruct((B, F, 1), jnp.float32),
        grid=(B,),
        in_specs=[pl.BlockSpec((1, F, D), lambda b: (b, 0, 0)),
                  pl.BlockSpec((F, 1), lambda b: (0, 0)),
                  pl.BlockSpec((F, 1), lambda b: (0, 0)),
                  pl.BlockSpec((D, 1), lambda b: (0, 0)),
                  pl.BlockSpec((1, 1), lambda b: (0, 0))],
        out_specs=pl.BlockSpec((1, F, 1), lambda b: (b, 0, 0)),
        compiler_params=pltpu.CompilerParams(dimension_semantics=("parallel",)),
    )(x, p["bn_scale"], p["bn_shift"], p["w_out"], p["b_out"])
    return out[:, :, 0]


# ---------------------------------------------------------------------------
# full forward:  TransformerVAE.forward(src) -> (reconstructed, mu, logvar)
# ---------------------------------------------------------------------------
def transformer_vae_forward(params, src, eps):
    B, F = src.shape
    D = params["enc_feat_w"].shape[1]

    # ---- encoder ----
    x = _embed(src, params["enc_feat_w"], params["enc_bias"])
    for layer in params["enc_layers"]:
        x = _mha_block(x, x, layer["sa"], NHEAD)
        x = _ffn_block(x, layer["ff"])
    mu, logvar = _enc_head(x, params["enc_head"])

    # ---- reparameterize (noise eps supplied by caller; torch uses randn_like) ----
    z = mu + eps * jnp.exp(0.5 * logvar)

    # ---- decoder ----
    memory = _embed(src, params["dec_feat_w"], params["dec_bias"])
    y = jnp.broadcast_to(z[:, None, :], (B, F, D))
    for layer in params["dec_layers"]:
        y = _mha_block(y, y, layer["sa"], NHEAD)          # self-attention
        y = _mha_block(y, memory, layer["ca"], NHEAD)     # cross-attention
        y = _ffn_block(y, layer["ff"])
    recon = _dec_head(y, params["dec_head"])
    return recon, mu, logvar


# ---------------------------------------------------------------------------
# parameter construction (random weights; eval-mode buffers at torch defaults)
# ---------------------------------------------------------------------------
def init_params(key, d_model=D_MODEL, dff=DIM_FF, num_layers=6, max_len=MAX_LEN):
    key_box = [key]

    def nkey():
        key_box[0], sub = jax.random.split(key_box[0])
        return sub

    def dense(shape, fan_in):
        return jax.random.normal(nkey(), shape, dtype=jnp.float32) * (1.0 / math.sqrt(fan_in))

    def mha_params(d):
        return dict(wq=dense((d, d), d), bq=jnp.zeros((1, d), jnp.float32),
                    wk=dense((d, d), d), bk=jnp.zeros((1, d), jnp.float32),
                    wv=dense((d, d), d), bv=jnp.zeros((1, d), jnp.float32),
                    wo=dense((d, d), d), bo=jnp.zeros((1, d), jnp.float32),
                    ln_w=jnp.ones((1, d), jnp.float32),
                    ln_b=jnp.zeros((1, d), jnp.float32))

    def ffn_params(d, f):
        return dict(w1=dense((d, f), d), b1=jnp.zeros((1, f), jnp.float32),
                    w2=dense((f, d), f), b2=jnp.zeros((1, d), jnp.float32),
                    ln_w=jnp.ones((1, d), jnp.float32),
                    ln_b=jnp.zeros((1, d), jnp.float32))

    att_raw = jnp.asarray(ATTRIBUTION_IDS)                               # (F,)
    att_norm = (att_raw - att_raw.min()) / (att_raw.max() - att_raw.min())
    F = att_raw.shape[0]
    pe = _build_pe_table(d_model, max_len)[:F]                            # (F, D) cached table

    # BatchNorm1d(F) eval-mode with default buffers folded into an affine
    running_mean = jnp.zeros((F,), jnp.float32)
    running_var = jnp.ones((F,), jnp.float32)
    gamma = jnp.ones((F,), jnp.float32)
    beta = jnp.zeros((F,), jnp.float32)
    bn_scale = (gamma / jnp.sqrt(running_var + BN_EPS))[:, None]          # (F,1)
    bn_shift = (beta - running_mean * gamma / jnp.sqrt(running_var + BN_EPS))[:, None]

    params = dict(
        enc_feat_w=dense((1, d_model), 1),
        enc_bias=pe + att_norm[:, None],          # PE + normalized attribution ids
        enc_layers=[dict(sa=mha_params(d_model), ff=ffn_params(d_model, dff))
                    for _ in range(num_layers)],
        enc_head=dict(w_mu=dense((d_model, d_model), d_model),
                      b_mu=jnp.zeros((1, d_model), jnp.float32),
                      w_lv=dense((d_model, d_model), d_model),
                      b_lv=jnp.zeros((1, d_model), jnp.float32)),
        dec_feat_w=dense((1, d_model), 1),
        dec_bias=pe + att_raw[:, None],           # PE + raw attribution ids
        dec_layers=[dict(sa=mha_params(d_model), ca=mha_params(d_model),
                         ff=ffn_params(d_model, dff)) for _ in range(num_layers)],
        dec_head=dict(bn_scale=bn_scale, bn_shift=bn_shift,
                      w_out=dense((d_model, 1), d_model),
                      b_out=jnp.zeros((1, 1), jnp.float32)),
    )
    return params


# ---------------------------------------------------------------------------
# pure-JAX reference (same math, no Pallas) for the self-check
# ---------------------------------------------------------------------------
def _ref_forward(params, src, eps):
    B, F = src.shape
    D = params["enc_feat_w"].shape[1]
    H = NHEAD
    hd = D // H

    def embed(s_, w, bias):
        return s_[:, :, None] * w[0][None, None, :] + bias[None]

    def mha(xq, xkv, p):
        q = (xq @ p["wq"] + p["bq"]).reshape(B, F, H, hd)
        k = (xkv @ p["wk"] + p["bk"]).reshape(B, F, H, hd)
        v = (xkv @ p["wv"] + p["bv"]).reshape(B, F, H, hd)
        s = jnp.einsum("bqhd,bkhd->bhqk", q, k) / math.sqrt(hd)
        s = s - jnp.max(s, axis=-1, keepdims=True)
        e = jnp.exp(s)
        a = e / jnp.sum(e, axis=-1, keepdims=True)
        ctx = jnp.einsum("bhqk,bkhd->bqhd", a, v).reshape(B, F, D)
        return ctx @ p["wo"] + p["bo"]

    def ffn(x, p):
        return _gelu_tanh(x @ p["w1"] + p["b1"]) @ p["w2"] + p["b2"]

    x = embed(src, params["enc_feat_w"], params["enc_bias"])
    for layer in params["enc_layers"]:
        x = _layer_norm(x + mha(x, x, layer["sa"]), layer["sa"]["ln_w"], layer["sa"]["ln_b"])
        x = _layer_norm(x + ffn(x, layer["ff"]), layer["ff"]["ln_w"], layer["ff"]["ln_b"])
    pooled = jnp.mean(x, axis=1)
    hp = params["enc_head"]
    mu = pooled @ hp["w_mu"] + hp["b_mu"][0]
    logvar = pooled @ hp["w_lv"] + hp["b_lv"][0]
    z = mu + eps * jnp.exp(0.5 * logvar)

    memory = embed(src, params["dec_feat_w"], params["dec_bias"])
    y = jnp.broadcast_to(z[:, None, :], (B, F, D))
    for layer in params["dec_layers"]:
        y = _layer_norm(y + mha(y, y, layer["sa"]), layer["sa"]["ln_w"], layer["sa"]["ln_b"])
        y = _layer_norm(y + mha(y, memory, layer["ca"]), layer["ca"]["ln_w"], layer["ca"]["ln_b"])
        y = _layer_norm(y + ffn(y, layer["ff"]), layer["ff"]["ln_w"], layer["ff"]["ln_b"])
    dh = params["dec_head"]
    yb = y * dh["bn_scale"][None] + dh["bn_shift"][None]
    sp = _softplus(yb)
    recon = (sp @ dh["w_out"])[:, :, 0] + dh["b_out"][0, 0]
    return recon, mu, logvar


# ---------------------------------------------------------------------------
if __name__ == "__main__":
    key = jax.random.PRNGKey(0)
    k_param, k_src, k_eps = jax.random.split(key, 3)

    # SMALL demo config: module default is num_layers=6; 2 layers keeps the demo
    # quick while exercising the exact same kernels / shapes.
    num_layers = 2
    params = init_params(k_param, num_layers=num_layers)

    B = 2
    src = jax.random.normal(k_src, (B, FEAT_LEN), dtype=jnp.float32)
    eps = jax.random.normal(k_eps, (B, D_MODEL), dtype=jnp.float32)   # reparam noise

    fwd = jax.jit(transformer_vae_forward)
    recon, mu, logvar = jax.block_until_ready(fwd(params, src, eps))

    assert recon.shape == (B, FEAT_LEN)
    assert mu.shape == (B, D_MODEL) and logvar.shape == (B, D_MODEL)

    # numerical self-check against a pure-JAX reference (high-precision matmuls)
    with jax.default_matmul_precision("float32"):
        ref_recon, ref_mu, ref_logvar = _ref_forward(params, src, eps)
    np.testing.assert_allclose(np.asarray(mu), np.asarray(ref_mu), rtol=2e-3, atol=2e-3)
    np.testing.assert_allclose(np.asarray(logvar), np.asarray(ref_logvar), rtol=2e-3, atol=2e-3)
    np.testing.assert_allclose(np.asarray(recon), np.asarray(ref_recon), rtol=2e-3, atol=2e-3)

    print("KERNEL_OK")
</pallas_src>

<mosaic_0001>
module attributes {stable_mosaic.version = 11 : i64} {
  func.func @_pe_kernel(%arg0: memref<1x256xf32, #tpu.memory_space<vmem>>, %arg1: memref<104x256xf32, #tpu.memory_space<vmem>>) attributes {dimension_semantics = [], scalar_prefetch = 0 : i64, scratch_operands = 0 : i64, tpu.core_type = #tpu.core_type<tc>} {
    %0 = tpu.iota {dimensions = array<i32: 0>} : vector<104x1xi32>
    %1 = arith.sitofp %0 : vector<104x1xi32> to vector<104x1xf32>
    %2 = tpu.iota {dimensions = array<i32: 1>} : vector<1x256xi32>
    %c2_i32 = arith.constant 2 : i32
    %c0_i32 = arith.constant 0 : i32
    %3 = arith.cmpi eq, %c2_i32, %c0_i32 : i32
    %c1_i32 = arith.constant 1 : i32
    %4 = arith.select %3, %c1_i32, %c2_i32 : i32
    %5 = vector.broadcast %4 : i32 to vector<1x256xi32>
    %6 = arith.remsi %2, %5 : vector<1x256xi32>
    %c0_i32_0 = arith.constant 0 : i32
    %7 = vector.broadcast %c0_i32_0 : i32 to vector<1x256xi32>
    %8 = arith.cmpi ne, %6, %7 : vector<1x256xi32>
    %c0_i32_1 = arith.constant 0 : i32
    %9 = vector.broadcast %c0_i32_1 : i32 to vector<1x256xi32>
    %10 = arith.cmpi slt, %6, %9 : vector<1x256xi32>
    %c0_i32_2 = arith.constant 0 : i32
    %11 = arith.cmpi slt, %4, %c0_i32_2 : i32
    %12 = vector.broadcast %11 : i1 to vector<1x256xi1>
    %13 = vector.broadcast %12 : vector<1x256xi1> to vector<1x256xi1>
    %14 = arith.xori %10, %13 : vector<1x256xi1>
    %15 = arith.andi %14, %8 : vector<1x256xi1>
    %16 = vector.broadcast %4 : i32 to vector<1x256xi32>
    %17 = arith.addi %6, %16 : vector<1x256xi32>
    %18 = arith.select %15, %17, %6 : vector<1x256xi1>, vector<1x256xi32>
    %c1_i32_3 = arith.constant 1 : i32
    %19 = vector.broadcast %c1_i32_3 : i32 to vector<1x256xi32>
    %20 = arith.cmpi eq, %18, %19 : vector<1x256xi32>
    %cst = arith.constant 1.57079637 : f32
    %cst_4 = arith.constant 0.000000e+00 : f32
    %21 = vector.broadcast %cst : f32 to vector<1x256xf32>
    %22 = vector.broadcast %cst_4 : f32 to vector<1x256xf32>
    %23 = arith.select %20, %21, %22 : vector<1x256xi1>, vector<1x256xf32>
    %c0 = arith.constant 0 : index
    %c0_5 = arith.constant 0 : index
    %24 = vector.load %arg0[%c0, %c0_5] : memref<1x256xf32, #tpu.memory_space<vmem>>, vector<1x256xf32>
    %25 = vector.broadcast %1 : vector<104x1xf32> to vector<104x256xf32>
    %26 = vector.broadcast %24 : vector<1x256xf32> to vector<104x256xf32>
    %27 = arith.mulf %25, %26 : vector<104x256xf32>
    %28 = vector.broadcast %23 : vector<1x256xf32> to vector<104x256xf32>
    %29 = arith.addf %27, %28 : vector<104x256xf32>
    %30 = math.sin %29 : vector<104x256xf32>
    %c0_6 = arith.constant 0 : index
    %c0_7 = arith.constant 0 : index
    %31 = vector.load %arg1[%c0_6, %c0_7] : memref<104x256xf32, #tpu.memory_space<vmem>>, vector<104x256xf32>
    tpu.vector_store %arg1[%c0_6, %c0_7], %30 {strides = array<i32>} : memref<104x256xf32, #tpu.memory_space<vmem>>, vector<104x256xf32>,
    return
  }
}

</mosaic_0001>

<llo_original>
// kernel: tpu_custom_call.1
$region0: #{tpu_custom_call.1}
  #allocation0 [shape = 'u32[]', space=smem, size = 0x4, offset = 0x4, fixed_abs, tag = 'smem constant byte address 0x4 - core index']
  #allocation1 [shape = 'u32[144,128]{1,0:T(1,128)}', space=vmem, size = 0x12000, scoped, tag = 'internal scratch']
  %s0 = inlined_call_operand.hbm [shape: f32[1,256], index: 0, kind: input, shape index: {}]
  %s1 = inlined_call_operand.hbm [shape: f32[104,256], index: 1, kind: output, shape index: {}]
  %s2 = sld [smem:[#allocation0]]
  $region18: #{tpu_custom_call.1} parent=0
    _
  %s4 = ssub.s32 1, %s2
  %s5 = scalar_select 0, %s4, %s2
  $region1: #{tpu_custom_call.1} parent=0
    #allocation2 [shape = 'u8[1024]{0}', space=vmem, size = 0x400, scoped, tag = 'input window, operand 0, single buffered']
    #allocation3 [shape = 's32[1]{0}', space=sflag, size = 0x4, scoped, tag = 'scoped memory for tpu_custom_call.1']
    #allocation4 [shape = 's32[1]{0}', space=sflag, size = 0x4, scoped, tag = 'scoped memory for tpu_custom_call.1']
    #allocation5 [shape = 'u8[106496]{0}', space=vmem, size = 0x1a000, scoped, tag = 'output window, operand 0, single buffered']
    %6 = vsyncpa [#allocation3], 0
    %7 = vsyncpa [#allocation4], 0
    // Predicated region
    $region2: #{tpu_custom_call.1} parent=1 // pred_check
      _
    $region3: #{tpu_custom_call.1} parent=1 // pred_check_branch
      %9 = sbr.rel (0) target = $region5
    $region4: #{tpu_custom_call.1} parent=1 // pred_region
      %s11 = ssub.s32 32, 32
      %12 = vsyncadd [#allocation3], %s11
      %s14 = sshll.u32 [#allocation2], 4
      %s15 = int_to_ptr.vmem [resolvable:$true] %s14
      %17 = dma.hbm_to_vmem [thread:$0]  %s0, 32, %s15, [#allocation3]
    $region5: #{tpu_custom_call.1} parent=1 // pred_fallthru
      _
    // Predicated region
    $region6: #{tpu_custom_call.1} parent=1 // pred_check
      _
    $region7: #{tpu_custom_call.1} parent=1 // pred_check_branch
      %19 = sbr.rel (0) target = $region9
    $region8: #{tpu_custom_call.1} parent=1 // pred_region
      %20 = dma.done [#allocation3], 32
    $region9: #{tpu_custom_call.1} parent=1 // pred_fallthru
      _
    %v21 = vlaneseq
    %v22 = vshrl.u32 %v21, 7
    %v23 = vadd.s32 %v22, 8
    %v24 = vadd.s32 %v22, 16
    %v25 = vadd.s32 %v22, 24
    %v26 = vadd.s32 %v22, 32
    %v27 = vadd.s32 %v22, 40
    %v28 = vadd.s32 %v22, 48
    %v29 = vadd.s32 %v22, 56
    %v30 = vadd.s32 %v22, 64
    %v31 = vadd.s32 %v22, 72
    %v32 = vadd.s32 %v22, 80
    %v33 = vadd.s32 %v22, 88
    %v34 = vadd.s32 %v22, 96
    %v35 = vcvt.s32.f32 %v22
    %v36 = vcvt.s32.f32 %v23
    %v37 = vcvt.s32.f32 %v24
    %v38 = vcvt.s32.f32 %v25
    %v39 = vcvt.s32.f32 %v26
    %v40 = vcvt.s32.f32 %v27
    %v41 = vcvt.s32.f32 %v28
    %v42 = vcvt.s32.f32 %v29
    %v43 = vcvt.s32.f32 %v30
    %v44 = vcvt.s32.f32 %v31
    %v45 = vcvt.s32.f32 %v32
    %v46 = vcvt.s32.f32 %v33
    %v47 = vcvt.s32.f32 %v34
    %v48 = vlaneseq
    %v49 = vand.u32 %v48, 127
    %v50 = vadd.s32 %v49, 128
    %vm51 = vcmp.lt.s32.totalorder %v49, 0
    %v52 = vsub.s32 0, %v49
    %v53 = vsel %vm51, %v52, %v49
    %v54 = vshrl.u32 %v53, 1
    %v55 = vand.u32 %v53, 1
    %v56 = vsub.s32 0, %v55
    %v57 = vsel %vm51, %v56, %v55
    %vm58 = vcmp.lt.s32.totalorder %v50, 0
    %v59 = vsub.s32 0, %v50
    %v60 = vsel %vm58, %v59, %v50
    %v61 = vshrl.u32 %v60, 1
    %v62 = vand.u32 %v60, 1
    %v63 = vsub.s32 0, %v62
    %v64 = vsel %vm58, %v63, %v62
    %vm65 = vcmp.ne.s32.totalorder %v57, 0
    %vm66 = vcmp.ne.s32.totalorder %v64, 0
    %vm67 = vcmp.lt.s32.totalorder %v57, 0
    %vm68 = vcmp.lt.s32.totalorder %v64, 0
    %vm69 = vmand %vm67, %vm65
    %vm70 = vmand %vm68, %vm66
    %v71 = vadd.s32 %v57, 2
    %v72 = vadd.s32 %v64, 2
    %v73 = vsel %vm69, %v71, %v57
    %v74 = vsel %vm70, %v72, %v64
    %vm75 = vcmp.eq.s32.totalorder %v73, 1
    %vm76 = vcmp.eq.s32.totalorder %v74, 1
    %v77 = vsel %vm75, 1.5707964, 0.0
    %v78 = vsel %vm76, 1.5707964, 0.0
    %v79 = vld [vmem:[#allocation2] sm:$0x3]
    %v81 = vlaneseq
    %v82 = vshrl.u32 %v81, 7
    %v83 = vsub.s32 0, %v82
    %v84 = vrot.slane %v79, %v83
    %v85 = vlaneseq
    %v86 = vshrl.u32 %v85, 7
    %v87 = vsub.s32 1, %v86
    %v88 = vrot.slane %v79, %v87
    %v91 = vmul.f32 %v35, %v84
    %v92 = vmul.f32 %v35, %v88
    %v93 = vmul.f32 %v36, %v84
    %v94 = vmul.f32 %v36, %v88
    %v95 = vmul.f32 %v37, %v84
    %v96 = vmul.f32 %v37, %v88
    %v97 = vmul.f32 %v38, %v84
    %v98 = vmul.f32 %v38, %v88
    %v99 = vmul.f32 %v39, %v84
    %v100 = vmul.f32 %v39, %v88
    %v101 = vmul.f32 %v40, %v84
    %v102 = vmul.f32 %v40, %v88
    %v103 = vmul.f32 %v41, %v84
    %v104 = vmul.f32 %v41, %v88
    %v105 = vmul.f32 %v42, %v84
    %v106 = vmul.f32 %v42, %v88
    %v107 = vmul.f32 %v43, %v84
    %v108 = vmul.f32 %v43, %v88
    %v109 = vmul.f32 %v44, %v84
    %v110 = vmul.f32 %v44, %v88
    %v111 = vmul.f32 %v45, %v84
    %v112 = vmul.f32 %v45, %v88
    %v113 = vmul.f32 %v46, %v84
    %v114 = vmul.f32 %v46, %v88
    %v115 = vmul.f32 %v47, %v84
    %v116 = vmul.f32 %v47, %v88
    %v117 = vadd.f32 %v91, %v77
    %v118 = vadd.f32 %v92, %v78
    %v119 = vadd.f32 %v93, %v77
    %v120 = vadd.f32 %v94, %v78
    %v121 = vadd.f32 %v95, %v77
    %v122 = vadd.f32 %v96, %v78
    %v123 = vadd.f32 %v97, %v77
    %v124 = vadd.f32 %v98, %v78
    %v125 = vadd.f32 %v99, %v77
    %v126 = vadd.f32 %v100, %v78
    %v127 = vadd.f32 %v101, %v77
    %v128 = vadd.f32 %v102, %v78
    %v129 = vadd.f32 %v103, %v77
    %v130 = vadd.f32 %v104, %v78
    %v131 = vadd.f32 %v105, %v77
    %v132 = vadd.f32 %v106, %v78
    %v133 = vadd.f32 %v107, %v77
    %v134 = vadd.f32 %v108, %v78
    %v135 = vadd.f32 %v109, %v77
    %v136 = vadd.f32 %v110, %v78
    %v137 = vadd.f32 %v111, %v77
    %v138 = vadd.f32 %v112, %v78
    %v139 = vadd.f32 %v113, %v77
    %v140 = vadd.f32 %v114, %v78
    %v141 = vadd.f32 %v115, %v77
    %v142 = vadd.f32 %v116, %v78
    %v143 = vand.u32 2147483647, %v117
    %vm144 = vcmp.le.f32.partialorder %v143, 0.7853982
    %vm145 = vcmp.lt.s32.totalorder %v117, 0
    %v146 = vand.u32 %v117, 2139095040
    %v147 = vshrl.u32 %v146, 23
    %v148 = vsub.s32 %v147, 127
    %v149 = vand.u32 2147483647, %v117
    %v150 = vand.u32 %v149, 8388607
    %v151 = vor.u32 %v150, 8388608
    %v152 = vsub.s32 0, %v151
    %v153 = vadd.s32 %v148, 1
    %vm154 = vcmp.gt.s32.totalorder %v153, 0
    %v155 = vsel %vm154, %v153, 0
    %v156 = vshrl.u32 %v155, 5
    %v157 = vand.u32 %v155, 31
    %v158 = vsub.s32 32, %v157
    %v159 = vshrl.u32 683565275, %v158
    %v160 = vshll.u32 683565275, %v157
    %v161 = vshrl.u32 2475754826, %v158
    %v162 = vor.u32 %v160, %v161
    %v163 = vshll.u32 2475754826, %v157
    %v164 = vshrl.u32 2131351028, %v158
    %v165 = vor.u32 %v163, %v164
    %v166 = vshll.u32 2131351028, %v157
    %v167 = vshrl.u32 2102212464, %v158
    %v168 = vor.u32 %v166, %v167
    %v169 = vshll.u32 2102212464, %v157
    %v170 = vshrl.u32 920167782, %v158
    %v171 = vor.u32 %v169, %v170
    %v172 = vshll.u32 920167782, %v157
    %v173 = vshrl.u32 1326507024, %v158
    %v174 = vor.u32 %v172, %v173
    %vm175 = vcmp.lt.s32.totalorder %v156, 1
    %vm176 = vcmp.lt.s32.totalorder %v156, 2
    %vm177 = vcmp.lt.s32.totalorder %v156, 3
    %vm178 = vcmp.lt.s32.totalorder %v156, 4
    %v179 = vsel %vm175, %v159, %v162
    %v180 = vsel %vm178, %v168, 2102212464
    %v181 = vsel %vm177, %v165, %v180
    %v182 = vsel %vm176, %v179, %v181
    %v183 = vsel %vm175, %v162, %v165
    %v184 = vsel %vm178, %v171, 920167782
    %v185 = vsel %vm177, %v168, %v184
    %v186 = vsel %vm176, %v183, %v185
    %v187 = vsel %vm175, %v165, %v168
    %v188 = vsel %vm178, %v174, 1326507024
    %v189 = vsel %vm177, %v171, %v188
    %v190 = vsel %vm176, %v187, %v189
    %v191 = vshll.u32 %v151, 8
    %v192 = vmul.u32.u64.compose %v191, %v190
    %v193 = vextract.low.u32 %v192
    %v194 = vextract.high.u32 %v192
    %v195 = vmul.u32.u64.compose %v191, %v186
    %v196 = vextract.low.u32 %v195
    %v197 = vextract.high.u32 %v195
    %v198 = vmul.u32 %v191, %v182
    %v199 = vadd.s32 %v194, %v196
    %vm200 = vc.u32 %v194, %v196
    %v201 = vadd.s32 %v197, 1
    %v202 = vsel %vm200, %v201, %v197
    %v203 = vadd.s32 %v198, %v202
    %v204 = vadd.s32 %v203, 536870912
    %v205 = vshrl.u32 %v204, 30
    %v206 = vshll.u32 %v205, 30
    %v207 = vsub.s32 %v203, %v206
    %vm208 = vcmp.lt.s32.totalorder %v207, 0
    %v209 = vsub.s32 0, %v207
    %v210 = vsel %vm208, %v209, %v207
    %v211 = vclz %v210
    %v212 = vsub.s32 %v211, 2
    %vm213 = vcmp.gt.s32.totalorder 0, %v212
    %v214 = vsel %vm213, 0, %v212
    %v215 = vsub.s32 32, %v214
    %v216 = vshll.u32 %v207, %v214
    %v217 = vshrl.u32 %v199, %v215
    %v218 = vor.u32 %v216, %v217
    %v219 = vsub.s32 4294967266, %v214
    %v220 = vadd.s32 %v219, 127
    %v221 = vshll.u32 %v220, 23
    %v222 = vor.u32 4788187, %v221
    %v223 = vand.u32 2147483647, %v222
    %v225 = vcvt.s32.f32 %v218
    %v226 = vmul.f32 %v225, %v223
    %v227 = vxor.u32 %v226, 2147483648
    %v228 = vsel %vm145, %v227, %v226
    %v229 = vsub.s32 4, %v205
    %v230 = vsel %vm145, %v229, %v205
    %v231 = vsel %vm144, %v117, %v228
    %v232 = vsel %vm144, 0, %v230
    %v233 = vcosq.f32.pop %v231
    %v234 = vsinq.f32.pop %v231
    %vm235 = vweird.f32 %v117
    %v236 = vadd.s32 %v232, 3
    %v237 = vand.u32 %v236, 3
    %vm238 = vcmp.lt.s32.totalorder %v237, 2
    %vm239 = vcmp.eq.s32.totalorder %v237, 0
    %v240 = vxor.u32 %v234, 2147483648
    %v241 = vsel %vm239, %v233, %v240
    %vm242 = vcmp.eq.s32.totalorder %v237, 2
    %v243 = vxor.u32 %v233, 2147483648
    %v244 = vsel %vm242, %v243, %v234
    %v245 = vsel %vm238, %v241, %v244
    %v246 = vsel %vm235, nan, %v245
    %v247 = vand.u32 2147483647, %v118
    %vm248 = vcmp.le.f32.partialorder %v247, 0.7853982
    %vm249 = vcmp.lt.s32.totalorder %v118, 0
    %v250 = vand.u32 %v118, 2139095040
    %v251 = vshrl.u32 %v250, 23
    %v252 = vsub.s32 %v251, 127
    %v253 = vand.u32 2147483647, %v118
    %v254 = vand.u32 %v253, 8388607
    %v255 = vor.u32 %v254, 8388608
    %v256 = vsub.s32 0, %v255
    %v257 = vadd.s32 %v252, 1
    %vm258 = vcmp.gt.s32.totalorder %v257, 0
    %v259 = vsel %vm258, %v257, 0
    %v260 = vshrl.u32 %v259, 5
    %v261 = vand.u32 %v259, 31
    %v262 = vsub.s32 32, %v261
    %v263 = vshrl.u32 683565275, %v262
    %v264 = vshll.u32 683565275, %v261
    %v265 = vshrl.u32 2475754826, %v262
    %v266 = vor.u32 %v264, %v265
    %v267 = vshll.u32 2475754826, %v261
    %v268 = vshrl.u32 2131351028, %v262
    %v269 = vor.u32 %v267, %v268
    %v270 = vshll.u32 2131351028, %v261
    %v271 = vshrl.u32 2102212464, %v262
    %v272 = vor.u32 %v270, %v271
    %v273 = vshll.u32 2102212464, %v261
    %v274 = vshrl.u32 920167782, %v262
    %v275 = vor.u32 %v273, %v274
    %v276 = vshll.u32 920167782, %v261
    %v277 = vshrl.u32 1326507024, %v262
    %v278 = vor.u32 %v276, %v277
    %vm279 = vcmp.lt.s32.totalorder %v260, 1
    %vm280 = vcmp.lt.s32.totalorder %v260, 2
    %vm281 = vcmp.lt.s32.totalorder %v260, 3
    %vm282 = vcmp.lt.s32.totalorder %v260, 4
    %v283 = vsel %vm279, %v263, %v266
    %v284 = vsel %vm282, %v272, 2102212464
    %v285 = vsel %vm281, %v269, %v284
    %v286 = vsel %vm280, %v283, %v285
    %v287 = vsel %vm279, %v266, %v269
    %v288 = vsel %vm282, %v275, 920167782
    %v289 = vsel %vm281, %v272, %v288
    %v290 = vsel %vm280, %v287, %v289
    %v291 = vsel %vm279, %v269, %v272
    %v292 = vsel %vm282, %v278, 1326507024
    %v293 = vsel %vm281, %v275, %v292
    %v294 = vsel %vm280, %v291, %v293
    %v295 = vshll.u32 %v255, 8
    %v296 = vmul.u32.u64.compose %v295, %v294
    %v297 = vextract.low.u32 %v296
    %v298 = vextract.high.u32 %v296
    %v299 = vmul.u32.u64.compose %v295, %v290
    %v300 = vextract.low.u32 %v299
    %v301 = vextract.high.u32 %v299
    %v302 = vmul.u32 %v295, %v286
    %v303 = vadd.s32 %v298, %v300
    %vm304 = vc.u32 %v298, %v300
    %v305 = vadd.s32 %v301, 1
    %v306 = vsel %vm304, %v305, %v301
    %v307 = vadd.s32 %v302, %v306
    %v308 = vadd.s32 %v307, 536870912
    %v309 = vshrl.u32 %v308, 30
    %v310 = vshll.u32 %v309, 30
    %v311 = vsub.s32 %v307, %v310
    %vm312 = vcmp.lt.s32.totalorder %v311, 0
    %v313 = vsub.s32 0, %v311
    %v314 = vsel %vm312, %v313, %v311
    %v315 = vclz %v314
    %v316 = vsub.s32 %v315, 2
    %vm317 = vcmp.gt.s32.totalorder 0, %v316
    %v318 = vsel %vm317, 0, %v316
    %v319 = vsub.s32 32, %v318
    %v320 = vshll.u32 %v311, %v318
    %v321 = vshrl.u32 %v303, %v319
    %v322 = vor.u32 %v320, %v321
    %v323 = vsub.s32 4294967266, %v318
    %v324 = vadd.s32 %v323, 127
    %v325 = vshll.u32 %v324, 23
    %v326 = vor.u32 4788187, %v325
    %v327 = vand.u32 2147483647, %v326
    %v329 = vcvt.s32.f32 %v322
    %v330 = vmul.f32 %v329, %v327
    %v331 = vxor.u32 %v330, 2147483648
    %v332 = vsel %vm249, %v331, %v330
    %v333 = vsub.s32 4, %v309
    %v334 = vsel %vm249, %v333, %v309
    %v335 = vsel %vm248, %v118, %v332
    %v336 = vsel %vm248, 0, %v334
    %v337 = vcosq.f32.pop %v335
    %v338 = vsinq.f32.pop %v335
    %vm339 = vweird.f32 %v118
    %v340 = vadd.s32 %v336, 3
    %v341 = vand.u32 %v340, 3
    %vm342 = vcmp.lt.s32.totalorder %v341, 2
    %vm343 = vcmp.eq.s32.totalorder %v341, 0
    %v344 = vxor.u32 %v338, 2147483648
    %v345 = vsel %vm343, %v337, %v344
    %vm346 = vcmp.eq.s32.totalorder %v341, 2
    %v347 = vxor.u32 %v337, 2147483648
    %v348 = vsel %vm346, %v347, %v338
    %v349 = vsel %vm342, %v345, %v348
    %v350 = vsel %vm339, nan, %v349
    %v351 = vand.u32 2147483647, %v119
    %vm352 = vcmp.le.f32.partialorder %v351, 0.7853982
    %vm353 = vcmp.lt.s32.totalorder %v119, 0
    %v354 = vand.u32 %v119, 2139095040
    %v355 = vshrl.u32 %v354, 23
    %v356 = vsub.s32 %v355, 127
    %v357 = vand.u32 2147483647, %v119
    %v358 = vand.u32 %v357, 8388607
    %v359 = vor.u32 %v358, 8388608
    %v360 = vsub.s32 0, %v359
    %v361 = vadd.s32 %v356, 1
    %vm362 = vcmp.gt.s32.totalorder %v361, 0
    %v363 = vsel %vm362, %v361, 0
    %v364 = vshrl.u32 %v363, 5
    %v365 = vand.u32 %v363, 31
    %v366 = vsub.s32 32, %v365
    %v367 = vshrl.u32 683565275, %v366
    %v368 = vshll.u32 683565275, %v365
    %v369 = vshrl.u32 2475754826, %v366
    %v370 = vor.u32 %v368, %v369
    %v371 = vshll.u32 2475754826, %v365
    %v372 = vshrl.u32 2131351028, %v366
    %v373 = vor.u32 %v371, %v372
    %v374 = vshll.u32 2131351028, %v365
    %v375 = vshrl.u32 2102212464, %v366
    %v376 = vor.u32 %v374, %v375
    %v377 = vshll.u32 2102212464, %v365
    %v378 = vshrl.u32 920167782, %v366
    %v379 = vor.u32 %v377, %v378
    %v380 = vshll.u32 920167782, %v365
    %v381 = vshrl.u32 1326507024, %v366
    %v382 = vor.u32 %v380, %v381
    %vm383 = vcmp.lt.s32.totalorder %v364, 1
    %vm384 = vcmp.lt.s32.totalorder %v364, 2
    %vm385 = vcmp.lt.s32.totalorder %v364, 3
    %vm386 = vcmp.lt.s32.totalorder %v364, 4
    %v387 = vsel %vm383, %v367, %v370
    %v388 = vsel %vm386, %v376, 2102212464
    %v389 = vsel %vm385, %v373, %v388
    %v390 = vsel %vm384, %v387, %v389
    %v391 = vsel %vm383, %v370, %v373
    %v392 = vsel %vm386, %v379, 920167782
    %v393 = vsel %vm385, %v376, %v392
    %v394 = vsel %vm384, %v391, %v393
    %v395 = vsel %vm383, %v373, %v376
    %v396 = vsel %vm386, %v382, 1326507024
    %v397 = vsel %vm385, %v379, %v396
    %v398 = vsel %vm384, %v395, %v397
    %v399 = vshll.u32 %v359, 8
    %v400 = vmul.u32.u64.compose %v399, %v398
    %v401 = vextract.low.u32 %v400
    %v402 = vextract.high.u32 %v400
    %v403 = vmul.u32.u64.compose %v399, %v394
    %v404 = vextract.low.u32 %v403
    %v405 = vextract.high.u32 %v403
    %v406 = vmul.u32 %v399, %v390
    %v407 = vadd.s32 %v402, %v404
    %vm408 = vc.u32 %v402, %v404
    %v409 = vadd.s32 %v405, 1
    %v410 = vsel %vm408, %v409, %v405
    %v411 = vadd.s32 %v406, %v410
    %v412 = vadd.s32 %v411, 536870912
    %v413 = vshrl.u32 %v412, 30
    %v414 = vshll.u32 %v413, 30
    %v415 = vsub.s32 %v411, %v414
    %vm416 = vcmp.lt.s32.totalorder %v415, 0
    %v417 = vsub.s32 0, %v415
    %v418 = vsel %vm416, %v417, %v415
    %v419 = vclz %v418
    %v420 = vsub.s32 %v419, 2
    %vm421 = vcmp.gt.s32.totalorder 0, %v420
    %v422 = vsel %vm421, 0, %v420
    %v423 = vsub.s32 32, %v422
    %v424 = vshll.u32 %v415, %v422
    %v425 = vshrl.u32 %v407, %v423
    %v426 = vor.u32 %v424, %v425
    %v427 = vsub.s32 4294967266, %v422
    %v428 = vadd.s32 %v427, 127
    %v429 = vshll.u32 %v428, 23
    %v430 = vor.u32 4788187, %v429
    %v431 = vand.u32 2147483647, %v430
    %v433 = vcvt.s32.f32 %v426
    %v434 = vmul.f32 %v433, %v431
    %v435 = vxor.u32 %v434, 2147483648
    %v436 = vsel %vm353, %v435, %v434
    %v437 = vsub.s32 4, %v413
    %v438 = vsel %vm353, %v437, %v413
    %v439 = vsel %vm352, %v119, %v436
    %v440 = vsel %vm352, 0, %v438
    %v441 = vcosq.f32.pop %v439
    %v442 = vsinq.f32.pop %v439
    %vm443 = vweird.f32 %v119
    %v444 = vadd.s32 %v440, 3
    %v445 = vand.u32 %v444, 3
    %vm446 = vcmp.lt.s32.totalorder %v445, 2
    %vm447 = vcmp.eq.s32.totalorder %v445, 0
    %v448 = vxor.u32 %v442, 2147483648
    %v449 = vsel %vm447, %v441, %v448
    %vm450 = vcmp.eq.s32.totalorder %v445, 2
    %v451 = vxor.u32 %v441, 2147483648
    %v452 = vsel %vm450, %v451, %v442
    %v453 = vsel %vm446, %v449, %v452
    %v454 = vsel %vm443, nan, %v453
    %v455 = vand.u32 2147483647, %v120
    %vm456 = vcmp.le.f32.partialorder %v455, 0.7853982
    %vm457 = vcmp.lt.s32.totalorder %v120, 0
    %v458 = vand.u32 %v120, 2139095040
    %v459 = vshrl.u32 %v458, 23
    %v460 = vsub.s32 %v459, 127
    %v461 = vand.u32 2147483647, %v120
    %v462 = vand.u32 %v461, 8388607
    %v463 = vor.u32 %v462, 8388608
    %v464 = vsub.s32 0, %v463
    %v465 = vadd.s32 %v460, 1
    %vm466 = vcmp.gt.s32.totalorder %v465, 0
    %v467 = vsel %vm466, %v465, 0
    %v468 = vshrl.u32 %v467, 5
    %v469 = vand.u32 %v467, 31
    %v470 = vsub.s32 32, %v469
    %v471 = vshrl.u32 683565275, %v470
    %v472 = vshll.u32 683565275, %v469
    %v473 = vshrl.u32 2475754826, %v470
    %v474 = vor.u32 %v472, %v473
    %v475 = vshll.u32 2475754826, %v469
    %v476 = vshrl.u32 2131351028, %v470
    %v477 = vor.u32 %v475, %v476
    %v478 = vshll.u32 2131351028, %v469
    %v479 = vshrl.u32 2102212464, %v470
    %v480 = vor.u32 %v478, %v479
    %v481 = vshll.u32 2102212464, %v469
    %v482 = vshrl.u32 920167782, %v470
    %v483 = vor.u32 %v481, %v482
    %v484 = vshll.u32 920167782, %v469
    %v485 = vshrl.u32 1326507024, %v470
    %v486 = vor.u32 %v484, %v485
    %vm487 = vcmp.lt.s32.totalorder %v468, 1
    %vm488 = vcmp.lt.s32.totalorder %v468, 2
    %vm489 = vcmp.lt.s32.totalorder %v468, 3
    %vm490 = vcmp.lt.s32.totalorder %v468, 4
    %v491 = vsel %vm487, %v471, %v474
    %v492 = vsel %vm490, %v480, 2102212464
    %v493 = vsel %vm489, %v477, %v492
    %v494 = vsel %vm488, %v491, %v493
    %v495 = vsel %vm487, %v474, %v477
    %v496 = vsel %vm490, %v483, 920167782
    %v497 = vsel %vm489, %v480, %v496
    %v498 = vsel %vm488, %v495, %v497
    %v499 = vsel %vm487, %v477, %v480
    %v500 = vsel %vm490, %v486, 1326507024
    %v501 = vsel %vm489, %v483, %v500
    %v502 = vsel %vm488, %v499, %v501
    %v503 = vshll.u32 %v463, 8
    %v504 = vmul.u32.u64.compose %v503, %v502
    %v505 = vextract.low.u32 %v504
    %v506 = vextract.high.u32 %v504
    %v507 = vmul.u32.u64.compose %v503, %v498
    %v508 = vextract.low.u32 %v507
    %v509 = vextract.high.u32 %v507
    %v510 = vmul.u32 %v503, %v494
    %v511 = vadd.s32 %v506, %v508
    %vm512 = vc.u32 %v506, %v508
    %v513 = vadd.s32 %v509, 1
    %v514 = vsel %vm512, %v513, %v509
    %v515 = vadd.s32 %v510, %v514
    %v516 = vadd.s32 %v515, 536870912
    %v517 = vshrl.u32 %v516, 30
    %v518 = vshll.u32 %v517, 30
    %v519 = vsub.s32 %v515, %v518
    %vm520 = vcmp.lt.s32.totalorder %v519, 0
    %v521 = vsub.s32 0, %v519
    %v522 = vsel %vm520, %v521, %v519
    %v523 = vclz %v522
    %v524 = vsub.s32 %v523, 2
    %vm525 = vcmp.gt.s32.totalorder 0, %v524
    %v526 = vsel %vm525, 0, %v524
    %v527 = vsub.s32 32, %v526
    %v528 = vshll.u32 %v519, %v526
    %v529 = vshrl.u32 %v511, %v527
    %v530 = vor.u32 %v528, %v529
    %v531 = vsub.s32 4294967266, %v526
    %v532 = vadd.s32 %v531, 127
    %v533 = vshll.u32 %v532, 23
    %v534 = vor.u32 4788187, %v533
    %v535 = vand.u32 2147483647, %v534
    %v537 = vcvt.s32.f32 %v530
    %v538 = vmul.f32 %v537, %v535
    %v539 = vxor.u32 %v538, 2147483648
    %v540 = vsel %vm457, %v539, %v538
    %v541 = vsub.s32 4, %v517
    %v542 = vsel %vm457, %v541, %v517
    %v543 = vsel %vm456, %v120, %v540
    %v544 = vsel %vm456, 0, %v542
    %v545 = vcosq.f32.pop %v543
    %v546 = vsinq.f32.pop %v543
    %vm547 = vweird.f32 %v120
    %v548 = vadd.s32 %v544, 3
    %v549 = vand.u32 %v548, 3
    %vm550 = vcmp.lt.s32.totalorder %v549, 2
    %vm551 = vcmp.eq.s32.totalorder %v549, 0
    %v552 = vxor.u32 %v546, 2147483648
    %v553 = vsel %vm551, %v545, %v552
    %vm554 = vcmp.eq.s32.totalorder %v549, 2
    %v555 = vxor.u32 %v545, 2147483648
    %v556 = vsel %vm554, %v555, %v546
    %v557 = vsel %vm550, %v553, %v556
    %v558 = vsel %vm547, nan, %v557
    %v559 = vand.u32 2147483647, %v121
    %vm560 = vcmp.le.f32.partialorder %v559, 0.7853982
    %vm561 = vcmp.lt.s32.totalorder %v121, 0
    %v562 = vand.u32 %v121, 2139095040
    %v563 = vshrl.u32 %v562, 23
    %v564 = vsub.s32 %v563, 127
    %v565 = vand.u32 2147483647, %v121
    %v566 = vand.u32 %v565, 8388607
    %v567 = vor.u32 %v566, 8388608
    %v568 = vsub.s32 0, %v567
    %v569 = vadd.s32 %v564, 1
    %vm570 = vcmp.gt.s32.totalorder %v569, 0
    %v571 = vsel %vm570, %v569, 0
    %v572 = vshrl.u32 %v571, 5
    %v573 = vand.u32 %v571, 31
    %v574 = vsub.s32 32, %v573
    %v575 = vshrl.u32 683565275, %v574
    %v576 = vshll.u32 683565275, %v573
    %v577 = vshrl.u32 2475754826, %v574
    %v578 = vor.u32 %v576, %v577
    %v579 = vshll.u32 2475754826, %v573
    %v580 = vshrl.u32 2131351028, %v574
    %v581 = vor.u32 %v579, %v580
    %v582 = vshll.u32 2131351028, %v573
    %v583 = vshrl.u32 2102212464, %v574
    %v584 = vor.u32 %v582, %v583
    %v585 = vshll.u32 2102212464, %v573
    %v586 = vshrl.u32 920167782, %v574
    %v587 = vor.u32 %v585, %v586
    %v588 = vshll.u32 920167782, %v573
    %v589 = vshrl.u32 1326507024, %v574
    %v590 = vor.u32 %v588, %v589
    %vm591 = vcmp.lt.s32.totalorder %v572, 1
    %vm592 = vcmp.lt.s32.totalorder %v572, 2
    %vm593 = vcmp.lt.s32.totalorder %v572, 3
    %vm594 = vcmp.lt.s32.totalorder %v572, 4
    %v595 = vsel %vm591, %v575, %v578
    %v596 = vsel %vm594, %v584, 2102212464
    %v597 = vsel %vm593, %v581, %v596
    %v598 = vsel %vm592, %v595, %v597
    %v599 = vsel %vm591, %v578, %v581
    %v600 = vsel %vm594, %v587, 920167782
    %v601 = vsel %vm593, %v584, %v600
    %v602 = vsel %vm592, %v599, %v601
    %v603 = vsel %vm591, %v581, %v584
    %v604 = vsel %vm594, %v590, 1326507024
    %v605 = vsel %vm593, %v587, %v604
    %v606 = vsel %vm592, %v603, %v605
    %v607 = vshll.u32 %v567, 8
    %v608 = vmul.u32.u64.compose %v607, %v606
    %v609 = vextract.low.u32 %v608
    %v610 = vextract.high.u32 %v608
    %v611 = vmul.u32.u64.compose %v607, %v602
    %v612 = vextract.low.u32 %v611
    %v613 = vextract.high.u32 %v611
    %v614 = vmul.u32 %v607, %v598
    %v615 = vadd.s32 %v610, %v612
    %vm616 = vc.u32 %v610, %v612
    %v617 = vadd.s32 %v613, 1
    %v618 = vsel %vm616, %v617, %v613
    %v619 = vadd.s32 %v614, %v618
    %v620 = vadd.s32 %v619, 536870912
    %v621 = vshrl.u32 %v620, 30
    %v622 = vshll.u32 %v621, 30
    %v623 = vsub.s32 %v619, %v622
    %vm624 = vcmp.lt.s32.totalorder %v623, 0
    %v625 = vsub.s32 0, %v623
    %v626 = vsel %vm624, %v625, %v623
    %v627 = vclz %v626
    %v628 = vsub.s32 %v627, 2
    %vm629 = vcmp.gt.s32.totalorder 0, %v628
    %v630 = vsel %vm629, 0, %v628
    %v631 = vsub.s32 32, %v630
    %v632 = vshll.u32 %v623, %v630
    %v633 = vshrl.u32 %v615, %v631
    %v634 = vor.u32 %v632, %v633
    %v635 = vsub.s32 4294967266, %v630
    %v636 = vadd.s32 %v635, 127
    %v637 = vshll.u32 %v636, 23
    %v638 = vor.u32 4788187, %v637
    %v639 = vand.u32 2147483647, %v638
    %v641 = vcvt.s32.f32 %v634
    %v642 = vmul.f32 %v641, %v639
    %v643 = vxor.u32 %v642, 2147483648
    %v644 = vsel %vm561, %v643, %v642
    %v645 = vsub.s32 4, %v621
    %v646 = vsel %vm561, %v645, %v621
    %v647 = vsel %vm560, %v121, %v644
    %v648 = vsel %vm560, 0, %v646
    %v649 = vcosq.f32.pop %v647
    %v650 = vsinq.f32.pop %v647
    %vm651 = vweird.f32 %v121
    %v652 = vadd.s32 %v648, 3
    %v653 = vand.u32 %v652, 3
    %vm654 = vcmp.lt.s32.totalorder %v653, 2
    %vm655 = vcmp.eq.s32.totalorder %v653, 0
    %v656 = vxor.u32 %v650, 2147483648
    %v657 = vsel %vm655, %v649, %v656
    %vm658 = vcmp.eq.s32.totalorder %v653, 2
    %v659 = vxor.u32 %v649, 2147483648
    %v660 = vsel %vm658, %v659, %v650
    %v661 = vsel %vm654, %v657, %v660
    %v662 = vsel %vm651, nan, %v661
    %v663 = vand.u32 2147483647, %v122
    %vm664 = vcmp.le.f32.partialorder %v663, 0.7853982
    %vm665 = vcmp.lt.s32.totalorder %v122, 0
    %v666 = vand.u32 %v122, 2139095040
    %v667 = vshrl.u32 %v666, 23
    %v668 = vsub.s32 %v667, 127
    %v669 = vand.u32 2147483647, %v122
    %v670 = vand.u32 %v669, 8388607
    %v671 = vor.u32 %v670, 8388608
    %v672 = vsub.s32 0, %v671
    %v673 = vadd.s32 %v668, 1
    %vm674 = vcmp.gt.s32.totalorder %v673, 0
    %v675 = vsel %vm674, %v673, 0
    %v676 = vshrl.u32 %v675, 5
    %v677 = vand.u32 %v675, 31
    %v678 = vsub.s32 32, %v677
    %v679 = vshrl.u32 683565275, %v678
    %v680 = vshll.u32 683565275, %v677
    %v681 = vshrl.u32 2475754826, %v678
    %v682 = vor.u32 %v680, %v681
    %v683 = vshll.u32 2475754826, %v677
    %v684 = vshrl.u32 2131351028, %v678
    %v685 = vor.u32 %v683, %v684
    %v686 = vshll.u32 2131351028, %v677
    %v687 = vshrl.u32 2102212464, %v678
    %v688 = vor.u32 %v686, %v687
    %v689 = vshll.u32 2102212464, %v677
    %v690 = vshrl.u32 920167782, %v678
    %v691 = vor.u32 %v689, %v690
    %v692 = vshll.u32 920167782, %v677
    %v693 = vshrl.u32 1326507024, %v678
    %v694 = vor.u32 %v692, %v693
    %vm695 = vcmp.lt.s32.totalorder %v676, 1
    %vm696 = vcmp.lt.s32.totalorder %v676, 2
    %vm697 = vcmp.lt.s32.totalorder %v676, 3
    %vm698 = vcmp.lt.s32.totalorder %v676, 4
    %v699 = vsel %vm695, %v679, %v682
    %v700 = vsel %vm698, %v688, 2102212464
    %v701 = vsel %vm697, %v685, %v700
    %v702 = vsel %vm696, %v699, %v701
    %v703 = vsel %vm695, %v682, %v685
    %v704 = vsel %vm698, %v691, 920167782
    %v705 = vsel %vm697, %v688, %v704
    %v706 = vsel %vm696, %v703, %v705
    %v707 = vsel %vm695, %v685, %v688
    %v708 = vsel %vm698, %v694, 1326507024
    %v709 = vsel %vm697, %v691, %v708
    %v710 = vsel %vm696, %v707, %v709
    %v711 = vshll.u32 %v671, 8
    %v712 = vmul.u32.u64.compose %v711, %v710
    %v713 = vextract.low.u32 %v712
    %v714 = vextract.high.u32 %v712
    %v715 = vmul.u32.u64.compose %v711, %v706
    %v716 = vextract.low.u32 %v715
    %v717 = vextract.high.u32 %v715
    %v718 = vmul.u32 %v711, %v702
    %v719 = vadd.s32 %v714, %v716
    %vm720 = vc.u32 %v714, %v716
    %v721 = vadd.s32 %v717, 1
    %v722 = vsel %vm720, %v721, %v717
    %v723 = vadd.s32 %v718, %v722
    %v724 = vadd.s32 %v723, 536870912
    %v725 = vshrl.u32 %v724, 30
    %v726 = vshll.u32 %v725, 30
    %v727 = vsub.s32 %v723, %v726
    %vm728 = vcmp.lt.s32.totalorder %v727, 0
    %v729 = vsub.s32 0, %v727
    %v730 = vsel %vm728, %v729, %v727
    %v731 = vclz %v730
    %v732 = vsub.s32 %v731, 2
    %vm733 = vcmp.gt.s32.totalorder 0, %v732
    %v734 = vsel %vm733, 0, %v732
    %v735 = vsub.s32 32, %v734
    %v736 = vshll.u32 %v727, %v734
    %v737 = vshrl.u32 %v719, %v735
    %v738 = vor.u32 %v736, %v737
    %v739 = vsub.s32 4294967266, %v734
    %v740 = vadd.s32 %v739, 127
    %v741 = vshll.u32 %v740, 23
    %v742 = vor.u32 4788187, %v741
    %v743 = vand.u32 2147483647, %v742
    %v745 = vcvt.s32.f32 %v738
    %v746 = vmul.f32 %v745, %v743
    %v747 = vxor.u32 %v746, 2147483648
    %v748 = vsel %vm665, %v747, %v746
    %v749 = vsub.s32 4, %v725
    %v750 = vsel %vm665, %v749, %v725
    %v751 = vsel %vm664, %v122, %v748
    %v752 = vsel %vm664, 0, %v750
    %v753 = vcosq.f32.pop %v751
    %v754 = vsinq.f32.pop %v751
    %vm755 = vweird.f32 %v122
    %v756 = vadd.s32 %v752, 3
    %v757 = vand.u32 %v756, 3
    %vm758 = vcmp.lt.s32.totalorder %v757, 2
    %vm759 = vcmp.eq.s32.totalorder %v757, 0
    %v760 = vxor.u32 %v754, 2147483648
    %v761 = vsel %vm759, %v753, %v760
    %vm762 = vcmp.eq.s32.totalorder %v757, 2
    %v763 = vxor.u32 %v753, 2147483648
    %v764 = vsel %vm762, %v763, %v754
    %v765 = vsel %vm758, %v761, %v764
    %v766 = vsel %vm755, nan, %v765
    %v767 = vand.u32 2147483647, %v123
    %vm768 = vcmp.le.f32.partialorder %v767, 0.7853982
    %vm769 = vcmp.lt.s32.totalorder %v123, 0
    %v770 = vand.u32 %v123, 2139095040
    %v771 = vshrl.u32 %v770, 23
    %v772 = vsub.s32 %v771, 127
    %v773 = vand.u32 2147483647, %v123
    %v774 = vand.u32 %v773, 8388607
    %v775 = vor.u32 %v774, 8388608
    %v776 = vsub.s32 0, %v775
    %v777 = vadd.s32 %v772, 1
    %vm778 = vcmp.gt.s32.totalorder %v777, 0
    %v779 = vsel %vm778, %v777, 0
    %v780 = vshrl.u32 %v779, 5
    %v781 = vand.u32 %v779, 31
    %v782 = vsub.s32 32, %v781
    %v783 = vshrl.u32 683565275, %v782
    %v784 = vshll.u32 683565275, %v781
    %v785 = vshrl.u32 2475754826, %v782
    %v786 = vor.u32 %v784, %v785
    %v787 = vshll.u32 2475754826, %v781
    %v788 = vshrl.u32 2131351028, %v782
    %v789 = vor.u32 %v787, %v788
    %v790 = vshll.u32 2131351028, %v781
    %v791 = vshrl.u32 2102212464, %v782
    %v792 = vor.u32 %v790, %v791
    %v793 = vshll.u32 2102212464, %v781
    %v794 = vshrl.u32 920167782, %v782
    %v795 = vor.u32 %v793, %v794
    %v796 = vshll.u32 920167782, %v781
    %v797 = vshrl.u32 1326507024, %v782
    %v798 = vor.u32 %v796, %v797
    %vm799 = vcmp.lt.s32.totalorder %v780, 1
    %vm800 = vcmp.lt.s32.totalorder %v780, 2
    %vm801 = vcmp.lt.s32.totalorder %v780, 3
    %vm802 = vcmp.lt.s32.totalorder %v780, 4
    %v803 = vsel %vm799, %v783, %v786
    %v804 = vsel %vm802, %v792, 2102212464
    %v805 = vsel %vm801, %v789, %v804
    %v806 = vsel %vm800, %v803, %v805
    %v807 = vsel %vm799, %v786, %v789
    %v808 = vsel %vm802, %v795, 920167782
    %v809 = vsel %vm801, %v792, %v808
    %v810 = vsel %vm800, %v807, %v809
    %v811 = vsel %vm799, %v789, %v792
    %v812 = vsel %vm802, %v798, 1326507024
    %v813 = vsel %vm801, %v795, %v812
    %v814 = vsel %vm800, %v811, %v813
    %v815 = vshll.u32 %v775, 8
    %v816 = vmul.u32.u64.compose %v815, %v814
    %v817 = vextract.low.u32 %v816
    %v818 = vextract.high.u32 %v816
    %v819 = vmul.u32.u64.compose %v815, %v810
    %v820 = vextract.low.u32 %v819
    %v821 = vextract.high.u32 %v819
    %v822 = vmul.u32 %v815, %v806
    %v823 = vadd.s32 %v818, %v820
    %vm824 = vc.u32 %v818, %v820
    %v825 = vadd.s32 %v821, 1
    %v826 = vsel %vm824, %v825, %v821
    %v827 = vadd.s32 %v822, %v826
    %v828 = vadd.s32 %v827, 536870912
    %v829 = vshrl.u32 %v828, 30
    %v830 = vshll.u32 %v829, 30
    %v831 = vsub.s32 %v827, %v830
    %vm832 = vcmp.lt.s32.totalorder %v831, 0
    %v833 = vsub.s32 0, %v831
    %v834 = vsel %vm832, %v833, %v831
    %v835 = vclz %v834
    %v836 = vsub.s32 %v835, 2
    %vm837 = vcmp.gt.s32.totalorder 0, %v836
    %v838 = vsel %vm837, 0, %v836
    %v839 = vsub.s32 32, %v838
    %v840 = vshll.u32 %v831, %v838
    %v841 = vshrl.u32 %v823, %v839
    %v842 = vor.u32 %v840, %v841
    %v843 = vsub.s32 4294967266, %v838
    %v844 = vadd.s32 %v843, 127
    %v845 = vshll.u32 %v844, 23
    %v846 = vor.u32 4788187, %v845
    %v847 = vand.u32 2147483647, %v846
    %v849 = vcvt.s32.f32 %v842
    %v850 = vmul.f32 %v849, %v847
    %v851 = vxor.u32 %v850, 2147483648
    %v852 = vsel %vm769, %v851, %v850
    %v853 = vsub.s32 4, %v829
    %v854 = vsel %vm769, %v853, %v829
    %v855 = vsel %vm768, %v123, %v852
    %v856 = vsel %vm768, 0, %v854
    %v857 = vcosq.f32.pop %v855
    %v858 = vsinq.f32.pop %v855
    %vm859 = vweird.f32 %v123
    %v860 = vadd.s32 %v856, 3
    %v861 = vand.u32 %v860, 3
    %vm862 = vcmp.lt.s32.totalorder %v861, 2
    %vm863 = vcmp.eq.s32.totalorder %v861, 0
    %v864 = vxor.u32 %v858, 2147483648
    %v865 = vsel %vm863, %v857, %v864
    %vm866 = vcmp.eq.s32.totalorder %v861, 2
    %v867 = vxor.u32 %v857, 2147483648
    %v868 = vsel %vm866, %v867, %v858
    %v869 = vsel %vm862, %v865, %v868
    %v870 = vsel %vm859, nan, %v869
    %v871 = vand.u32 2147483647, %v124
    %vm872 = vcmp.le.f32.partialorder %v871, 0.7853982
    %vm873 = vcmp.lt.s32.totalorder %v124, 0
    %v874 = vand.u32 %v124, 2139095040
    %v875 = vshrl.u32 %v874, 23
    %v876 = vsub.s32 %v875, 127
    %v877 = vand.u32 2147483647, %v124
    %v878 = vand.u32 %v877, 8388607
    %v879 = vor.u32 %v878, 8388608
    %v880 = vsub.s32 0, %v879
    %v881 = vadd.s32 %v876, 1
    %vm882 = vcmp.gt.s32.totalorder %v881, 0
    %v883 = vsel %vm882, %v881, 0
    %v884 = vshrl.u32 %v883, 5
    %v885 = vand.u32 %v883, 31
    %v886 = vsub.s32 32, %v885
    %v887 = vshrl.u32 683565275, %v886
    %v888 = vshll.u32 683565275, %v885
    %v889 = vshrl.u32 2475754826, %v886
    %v890 = vor.u32 %v888, %v889
    %v891 = vshll.u32 2475754826, %v885
    %v892 = vshrl.u32 2131351028, %v886
    %v893 = vor.u32 %v891, %v892
    %v894 = vshll.u32 2131351028, %v885
    %v895 = vshrl.u32 2102212464, %v886
    %v896 = vor.u32 %v894, %v895
    %v897 = vshll.u32 2102212464, %v885
    %v898 = vshrl.u32 920167782, %v886
    %v899 = vor.u32 %v897, %v898
    %v900 = vshll.u32 920167782, %v885
    %v901 = vshrl.u32 1326507024, %v886
    %v902 = vor.u32 %v900, %v901
    %vm903 = vcmp.lt.s32.totalorder %v884, 1
    %vm904 = vcmp.lt.s32.totalorder %v884, 2
    %vm905 = vcmp.lt.s32.totalorder %v884, 3
    %vm906 = vcmp.lt.s32.totalorder %v884, 4
    %v907 = vsel %vm903, %v887, %v890
    %v908 = vsel %vm906, %v896, 2102212464
    %v909 = vsel %vm905, %v893, %v908
    %v910 = vsel %vm904, %v907, %v909
    %v911 = vsel %vm903, %v890, %v893
    %v912 = vsel %vm906, %v899, 920167782
    %v913 = vsel %vm905, %v896, %v912
    %v914 = vsel %vm904, %v911, %v913
    %v915 = vsel %vm903, %v893, %v896
    %v916 = vsel %vm906, %v902, 1326507024
    %v917 = vsel %vm905, %v899, %v916
    %v918 = vsel %vm904, %v915, %v917
    %v919 = vshll.u32 %v879, 8
    %v920 = vmul.u32.u64.compose %v919, %v918
    %v921 = vextract.low.u32 %v920
    %v922 = vextract.high.u32 %v920
    %v923 = vmul.u32.u64.compose %v919, %v914
    %v924 = vextract.low.u32 %v923
    %v925 = vextract.high.u32 %v923
    %v926 = vmul.u32 %v919, %v910
    %v927 = vadd.s32 %v922, %v924
    %vm928 = vc.u32 %v922, %v924
    %v929 = vadd.s32 %v925, 1
    %v930 = vsel %vm928, %v929, %v925
    %v931 = vadd.s32 %v926, %v930
    %v932 = vadd.s32 %v931, 536870912
    %v933 = vshrl.u32 %v932, 30
    %v934 = vshll.u32 %v933, 30
    %v935 = vsub.s32 %v931, %v934
    %vm936 = vcmp.lt.s32.totalorder %v935, 0
    %v937 = vsub.s32 0, %v935
    %v938 = vsel %vm936, %v937, %v935
    %v939 = vclz %v938
    %v940 = vsub.s32 %v939, 2
    %vm941 = vcmp.gt.s32.totalorder 0, %v940
    %v942 = vsel %vm941, 0, %v940
    %v943 = vsub.s32 32, %v942
    %v944 = vshll.u32 %v935, %v942
    %v945 = vshrl.u32 %v927, %v943
    %v946 = vor.u32 %v944, %v945
    %v947 = vsub.s32 4294967266, %v942
    %v948 = vadd.s32 %v947, 127
    %v949 = vshll.u32 %v948, 23
    %v950 = vor.u32 4788187, %v949
    %v951 = vand.u32 2147483647, %v950
    %v953 = vcvt.s32.f32 %v946
    %v954 = vmul.f32 %v953, %v951
    %v955 = vxor.u32 %v954, 2147483648
    %v956 = vsel %vm873, %v955, %v954
    %v957 = vsub.s32 4, %v933
    %v958 = vsel %vm873, %v957, %v933
    %v959 = vsel %vm872, %v124, %v956
    %v960 = vsel %vm872, 0, %v958
    %v961 = vcosq.f32.pop %v959
    %v962 = vsinq.f32.pop %v959
    %vm963 = vweird.f32 %v124
    %v964 = vadd.s32 %v960, 3
    %v965 = vand.u32 %v964, 3
    %vm966 = vcmp.lt.s32.totalorder %v965, 2
    %vm967 = vcmp.eq.s32.totalorder %v965, 0
    %v968 = vxor.u32 %v962, 2147483648
    %v969 = vsel %vm967, %v961, %v968
    %vm970 = vcmp.eq.s32.totalorder %v965, 2
    %v971 = vxor.u32 %v961, 2147483648
    %v972 = vsel %vm970, %v971, %v962
    %v973 = vsel %vm966, %v969, %v972
    %v974 = vsel %vm963, nan, %v973
    %v975 = vand.u32 2147483647, %v125
    %vm976 = vcmp.le.f32.partialorder %v975, 0.7853982
    %vm977 = vcmp.lt.s32.totalorder %v125, 0
    %v978 = vand.u32 %v125, 2139095040
    %v979 = vshrl.u32 %v978, 23
    %v980 = vsub.s32 %v979, 127
    %v981 = vand.u32 2147483647, %v125
    %v982 = vand.u32 %v981, 8388607
    %v983 = vor.u32 %v982, 8388608
    %v984 = vsub.s32 0, %v983
    %v985 = vadd.s32 %v980, 1
    %vm986 = vcmp.gt.s32.totalorder %v985, 0
    %v987 = vsel %vm986, %v985, 0
    %v988 = vshrl.u32 %v987, 5
    %v989 = vand.u32 %v987, 31
    %v990 = vsub.s32 32, %v989
    %v991 = vshrl.u32 683565275, %v990
    %v992 = vshll.u32 683565275, %v989
    %v993 = vshrl.u32 2475754826, %v990
    %v994 = vor.u32 %v992, %v993
    %v995 = vshll.u32 2475754826, %v989
    %v996 = vshrl.u32 2131351028, %v990
    %v997 = vor.u32 %v995, %v996
    %v998 = vshll.u32 2131351028, %v989
    %v999 = vshrl.u32 2102212464, %v990
    %v1000 = vor.u32 %v998, %v999
    %v1001 = vshll.u32 2102212464, %v989
    %v1002 = vshrl.u32 920167782, %v990
    %v1003 = vor.u32 %v1001, %v1002
    %v1004 = vshll.u32 920167782, %v989
    %v1005 = vshrl.u32 1326507024, %v990
    %v1006 = vor.u32 %v1004, %v1005
    %vm1007 = vcmp.lt.s32.totalorder %v988, 1
    %vm1008 = vcmp.lt.s32.totalorder %v988, 2
    %vm1009 = vcmp.lt.s32.totalorder %v988, 3
    %vm1010 = vcmp.lt.s32.totalorder %v988, 4
    %v1011 = vsel %vm1007, %v991, %v994
    %v1012 = vsel %vm1010, %v1000, 2102212464
    %v1013 = vsel %vm1009, %v997, %v1012
    %v1014 = vsel %vm1008, %v1011, %v1013
    %v1015 = vsel %vm1007, %v994, %v997
    %v1016 = vsel %vm1010, %v1003, 920167782
    %v1017 = vsel %vm1009, %v1000, %v1016
    %v1018 = vsel %vm1008, %v1015, %v1017
    %v1019 = vsel %vm1007, %v997, %v1000
    %v1020 = vsel %vm1010, %v1006, 1326507024
    %v1021 = vsel %vm1009, %v1003, %v1020
    %v1022 = vsel %vm1008, %v1019, %v1021
    %v1023 = vshll.u32 %v983, 8
    %v1024 = vmul.u32.u64.compose %v1023, %v1022
    %v1025 = vextract.low.u32 %v1024
    %v1026 = vextract.high.u32 %v1024
    %v1027 = vmul.u32.u64.compose %v1023, %v1018
    %v1028 = vextract.low.u32 %v1027
    %v1029 = vextract.high.u32 %v1027
    %v1030 = vmul.u32 %v1023, %v1014
    %v1031 = vadd.s32 %v1026, %v1028
    %vm1032 = vc.u32 %v1026, %v1028
    %v1033 = vadd.s32 %v1029, 1
    %v1034 = vsel %vm1032, %v1033, %v1029
    %v1035 = vadd.s32 %v1030, %v1034
    %v1036 = vadd.s32 %v1035, 536870912
    %v1037 = vshrl.u32 %v1036, 30
    %v1038 = vshll.u32 %v1037, 30
    %v1039 = vsub.s32 %v1035, %v1038
    %vm1040 = vcmp.lt.s32.totalorder %v1039, 0
    %v1041 = vsub.s32 0, %v1039
    %v1042 = vsel %vm1040, %v1041, %v1039
    %v1043 = vclz %v1042
    %v1044 = vsub.s32 %v1043, 2
    %vm1045 = vcmp.gt.s32.totalorder 0, %v1044
    %v1046 = vsel %vm1045, 0, %v1044
    %v1047 = vsub.s32 32, %v1046
    %v1048 = vshll.u32 %v1039, %v1046
    %v1049 = vshrl.u32 %v1031, %v1047
    %v1050 = vor.u32 %v1048, %v1049
    %v1051 = vsub.s32 4294967266, %v1046
    %v1052 = vadd.s32 %v1051, 127
    %v1053 = vshll.u32 %v1052, 23
    %v1054 = vor.u32 4788187, %v1053
    %v1055 = vand.u32 2147483647, %v1054
    %v1057 = vcvt.s32.f32 %v1050
    %v1058 = vmul.f32 %v1057, %v1055
    %v1059 = vxor.u32 %v1058, 2147483648
    %v1060 = vsel %vm977, %v1059, %v1058
    %v1061 = vsub.s32 4, %v1037
    %v1062 = vsel %vm977, %v1061, %v1037
    %v1063 = vsel %vm976, %v125, %v1060
    %v1064 = vsel %vm976, 0, %v1062
    %v1065 = vcosq.f32.pop %v1063
    %v1066 = vsinq.f32.pop %v1063
    %vm1067 = vweird.f32 %v125
    %v1068 = vadd.s32 %v1064, 3
    %v1069 = vand.u32 %v1068, 3
    %vm1070 = vcmp.lt.s32.totalorder %v1069, 2
    %vm1071 = vcmp.eq.s32.totalorder %v1069, 0
    %v1072 = vxor.u32 %v1066, 2147483648
    %v1073 = vsel %vm1071, %v1065, %v1072
    %vm1074 = vcmp.eq.s32.totalorder %v1069, 2
    %v1075 = vxor.u32 %v1065, 2147483648
    %v1076 = vsel %vm1074, %v1075, %v1066
    %v1077 = vsel %vm1070, %v1073, %v1076
    %v1078 = vsel %vm1067, nan, %v1077
    %v1079 = vand.u32 2147483647, %v126
    %vm1080 = vcmp.le.f32.partialorder %v1079, 0.7853982
    %vm1081 = vcmp.lt.s32.totalorder %v126, 0
    %v1082 = vand.u32 %v126, 2139095040
    %v1083 = vshrl.u32 %v1082, 23
    %v1084 = vsub.s32 %v1083, 127
    %v1085 = vand.u32 2147483647, %v126
    %v1086 = vand.u32 %v1085, 8388607
    %v1087 = vor.u32 %v1086, 8388608
    %v1088 = vsub.s32 0, %v1087
    %v1089 = vadd.s32 %v1084, 1
    %vm1090 = vcmp.gt.s32.totalorder %v1089, 0
    %v1091 = vsel %vm1090, %v1089, 0
    %v1092 = vshrl.u32 %v1091, 5
    %v1093 = vand.u32 %v1091, 31
    %v1094 = vsub.s32 32, %v1093
    %v1095 = vshrl.u32 683565275, %v1094
    %v1096 = vshll.u32 683565275, %v1093
    %v1097 = vshrl.u32 2475754826, %v1094
    %v1098 = vor.u32 %v1096, %v1097
    %v1099 = vshll.u32 2475754826, %v1093
    %v1100 = vshrl.u32 2131351028, %v1094
    %v1101 = vor.u32 %v1099, %v1100
    %v1102 = vshll.u32 2131351028, %v1093
    %v1103 = vshrl.u32 2102212464, %v1094
    %v1104 = vor.u32 %v1102, %v1103
    %v1105 = vshll.u32 2102212464, %v1093
    %v1106 = vshrl.u32 920167782, %v1094
    %v1107 = vor.u32 %v1105, %v1106
    %v1108 = vshll.u32 920167782, %v1093
    %v1109 = vshrl.u32 1326507024, %v1094
    %v1110 = vor.u32 %v1108, %v1109
    %vm1111 = vcmp.lt.s32.totalorder %v1092, 1
    %vm1112 = vcmp.lt.s32.totalorder %v1092, 2
    %vm1113 = vcmp.lt.s32.totalorder %v1092, 3
    %vm1114 = vcmp.lt.s32.totalorder %v1092, 4
    %v1115 = vsel %vm1111, %v1095, %v1098
    %v1116 = vsel %vm1114, %v1104, 2102212464
    %v1117 = vsel %vm1113, %v1101, %v1116
    %v1118 = vsel %vm1112, %v1115, %v1117
    %v1119 = vsel %vm1111, %v1098, %v1101
    %v1120 = vsel %vm1114, %v1107, 920167782
    %v1121 = vsel %vm1113, %v1104, %v1120
    %v1122 = vsel %vm1112, %v1119, %v1121
    %v1123 = vsel %vm1111, %v1101, %v1104
    %v1124 = vsel %vm1114, %v1110, 1326507024
    %v1125 = vsel %vm1113, %v1107, %v1124
    %v1126 = vsel %vm1112, %v1123, %v1125
    %v1127 = vshll.u32 %v1087, 8
    %v1128 = vmul.u32.u64.compose %v1127, %v1126
    %v1129 = vextract.low.u32 %v1128
    %v1130 = vextract.high.u32 %v1128
    %v1131 = vmul.u32.u64.compose %v1127, %v1122
    %v1132 = vextract.low.u32 %v1131
    %v1133 = vextract.high.u32 %v1131
    %v1134 = vmul.u32 %v1127, %v1118
    %v1135 = vadd.s32 %v1130, %v1132
    %vm1136 = vc.u32 %v1130, %v1132
    %v1137 = vadd.s32 %v1133, 1
    %v1138 = vsel %vm1136, %v1137, %v1133
    %v1139 = vadd.s32 %v1134, %v1138
    %v1140 = vadd.s32 %v1139, 536870912
    %v1141 = vshrl.u32 %v1140, 30
    %v1142 = vshll.u32 %v1141, 30
    %v1143 = vsub.s32 %v1139, %v1142
    %vm1144 = vcmp.lt.s32.totalorder %v1143, 0
    %v1145 = vsub.s32 0, %v1143
    %v1146 = vsel %vm1144, %v1145, %v1143
    %v1147 = vclz %v1146
    %v1148 = vsub.s32 %v1147, 2
    %vm1149 = vcmp.gt.s32.totalorder 0, %v1148
    %v1150 = vsel %vm1149, 0, %v1148
    %v1151 = vsub.s32 32, %v1150
    %v1152 = vshll.u32 %v1143, %v1150
    %v1153 = vshrl.u32 %v1135, %v1151
    %v1154 = vor.u32 %v1152, %v1153
    %v1155 = vsub.s32 4294967266, %v1150
    %v1156 = vadd.s32 %v1155, 127
    %v1157 = vshll.u32 %v1156, 23
    %v1158 = vor.u32 4788187, %v1157
    %v1159 = vand.u32 2147483647, %v1158
    %v1161 = vcvt.s32.f32 %v1154
    %v1162 = vmul.f32 %v1161, %v1159
    %v1163 = vxor.u32 %v1162, 2147483648
    %v1164 = vsel %vm1081, %v1163, %v1162
    %v1165 = vsub.s32 4, %v1141
    %v1166 = vsel %vm1081, %v1165, %v1141
    %v1167 = vsel %vm1080, %v126, %v1164
    %v1168 = vsel %vm1080, 0, %v1166
    %v1169 = vcosq.f32.pop %v1167
    %v1170 = vsinq.f32.pop %v1167
    %vm1171 = vweird.f32 %v126
    %v1172 = vadd.s32 %v1168, 3
    %v1173 = vand.u32 %v1172, 3
    %vm1174 = vcmp.lt.s32.totalorder %v1173, 2
    %vm1175 = vcmp.eq.s32.totalorder %v1173, 0
    %v1176 = vxor.u32 %v1170, 2147483648
    %v1177 = vsel %vm1175, %v1169, %v1176
    %vm1178 = vcmp.eq.s32.totalorder %v1173, 2
    %v1179 = vxor.u32 %v1169, 2147483648
    %v1180 = vsel %vm1178, %v1179, %v1170
    %v1181 = vsel %vm1174, %v1177, %v1180
    %v1182 = vsel %vm1171, nan, %v1181
    %v1183 = vand.u32 2147483647, %v127
    %vm1184 = vcmp.le.f32.partialorder %v1183, 0.7853982
    %vm1185 = vcmp.lt.s32.totalorder %v127, 0
    %v1186 = vand.u32 %v127, 2139095040
    %v1187 = vshrl.u32 %v1186, 23
    %v1188 = vsub.s32 %v1187, 127
    %v1189 = vand.u32 2147483647, %v127
    %v1190 = vand.u32 %v1189, 8388607
    %v1191 = vor.u32 %v1190, 8388608
    %v1192 = vsub.s32 0, %v1191
    %v1193 = vadd.s32 %v1188, 1
    %vm1194 = vcmp.gt.s32.totalorder %v1193, 0
    %v1195 = vsel %vm1194, %v1193, 0
    %v1196 = vshrl.u32 %v1195, 5
    %v1197 = vand.u32 %v1195, 31
    %v1198 = vsub.s32 32, %v1197
    %v1199 = vshrl.u32 683565275, %v1198
    %v1200 = vshll.u32 683565275, %v1197
    %v1201 = vshrl.u32 2475754826, %v1198
    %v1202 = vor.u32 %v1200, %v1201
    %v1203 = vshll.u32 2475754826, %v1197
    %v1204 = vshrl.u32 2131351028, %v1198
    %v1205 = vor.u32 %v1203, %v1204
    %v1206 = vshll.u32 2131351028, %v1197
    %v1207 = vshrl.u32 2102212464, %v1198
    %v1208 = vor.u32 %v1206, %v1207
    %v1209 = vshll.u32 2102212464, %v1197
    %v1210 = vshrl.u32 920167782, %v1198
    %v1211 = vor.u32 %v1209, %v1210
    %v1212 = vshll.u32 920167782, %v1197
    %v1213 = vshrl.u32 1326507024, %v1198
    %v1214 = vor.u32 %v1212, %v1213
    %vm1215 = vcmp.lt.s32.totalorder %v1196, 1
    %vm1216 = vcmp.lt.s32.totalorder %v1196, 2
    %vm1217 = vcmp.lt.s32.totalorder %v1196, 3
    %vm1218 = vcmp.lt.s32.totalorder %v1196, 4
    %v1219 = vsel %vm1215, %v1199, %v1202
    %v1220 = vsel %vm1218, %v1208, 2102212464
    %v1221 = vsel %vm1217, %v1205, %v1220
    %v1222 = vsel %vm1216, %v1219, %v1221
    %v1223 = vsel %vm1215, %v1202, %v1205
    %v1224 = vsel %vm1218, %v1211, 920167782
    %v1225 = vsel %vm1217, %v1208, %v1224
    %v1226 = vsel %vm1216, %v1223, %v1225
    %v1227 = vsel %vm1215, %v1205, %v1208
    %v1228 = vsel %vm1218, %v1214, 1326507024
    %v1229 = vsel %vm1217, %v1211, %v1228
    %v1230 = vsel %vm1216, %v1227, %v1229
    %v1231 = vshll.u32 %v1191, 8
    %v1232 = vmul.u32.u64.compose %v1231, %v1230
    %v1233 = vextract.low.u32 %v1232
    %v1234 = vextract.high.u32 %v1232
    %v1235 = vmul.u32.u64.compose %v1231, %v1226
    %v1236 = vextract.low.u32 %v1235
    %v1237 = vextract.high.u32 %v1235
    %v1238 = vmul.u32 %v1231, %v1222
    %v1239 = vadd.s32 %v1234, %v1236
    %vm1240 = vc.u32 %v1234, %v1236
    %v1241 = vadd.s32 %v1237, 1
    %v1242 = vsel %vm1240, %v1241, %v1237
    %v1243 = vadd.s32 %v1238, %v1242
    %v1244 = vadd.s32 %v1243, 536870912
    %v1245 = vshrl.u32 %v1244, 30
    %v1246 = vshll.u32 %v1245, 30
    %v1247 = vsub.s32 %v1243, %v1246
    %vm1248 = vcmp.lt.s32.totalorder %v1247, 0
    %v1249 = vsub.s32 0, %v1247
    %v1250 = vsel %vm1248, %v1249, %v1247
    %v1251 = vclz %v1250
    %v1252 = vsub.s32 %v1251, 2
    %vm1253 = vcmp.gt.s32.totalorder 0, %v1252
    %v1254 = vsel %vm1253, 0, %v1252
    %v1255 = vsub.s32 32, %v1254
    %v1256 = vshll.u32 %v1247, %v1254
    %v1257 = vshrl.u32 %v1239, %v1255
    %v1258 = vor.u32 %v1256, %v1257
    %v1259 = vsub.s32 4294967266, %v1254
    %v1260 = vadd.s32 %v1259, 127
    %v1261 = vshll.u32 %v1260, 23
    %v1262 = vor.u32 4788187, %v1261
    %v1263 = vand.u32 2147483647, %v1262
    %v1265 = vcvt.s32.f32 %v1258
    %v1266 = vmul.f32 %v1265, %v1263
    %v1267 = vxor.u32 %v1266, 2147483648
    %v1268 = vsel %vm1185, %v1267, %v1266
    %v1269 = vsub.s32 4, %v1245
    %v1270 = vsel %vm1185, %v1269, %v1245
    %v1271 = vsel %vm1184, %v127, %v1268
    %v1272 = vsel %vm1184, 0, %v1270
    %v1273 = vcosq.f32.pop %v1271
    %v1274 = vsinq.f32.pop %v1271
    %vm1275 = vweird.f32 %v127
    %v1276 = vadd.s32 %v1272, 3
    %v1277 = vand.u32 %v1276, 3
    %vm1278 = vcmp.lt.s32.totalorder %v1277, 2
    %vm1279 = vcmp.eq.s32.totalorder %v1277, 0
    %v1280 = vxor.u32 %v1274, 2147483648
    %v1281 = vsel %vm1279, %v1273, %v1280
    %vm1282 = vcmp.eq.s32.totalorder %v1277, 2
    %v1283 = vxor.u32 %v1273, 2147483648
    %v1284 = vsel %vm1282, %v1283, %v1274
    %v1285 = vsel %vm1278, %v1281, %v1284
    %v1286 = vsel %vm1275, nan, %v1285
    %v1287 = vand.u32 2147483647, %v128
    %vm1288 = vcmp.le.f32.partialorder %v1287, 0.7853982
    %vm1289 = vcmp.lt.s32.totalorder %v128, 0
    %v1290 = vand.u32 %v128, 2139095040
    %v1291 = vshrl.u32 %v1290, 23
    %v1292 = vsub.s32 %v1291, 127
    %v1293 = vand.u32 2147483647, %v128
    %v1294 = vand.u32 %v1293, 8388607
    %v1295 = vor.u32 %v1294, 8388608
    %v1296 = vsub.s32 0, %v1295
    %v1297 = vadd.s32 %v1292, 1
    %vm1298 = vcmp.gt.s32.totalorder %v1297, 0
    %v1299 = vsel %vm1298, %v1297, 0
    %v1300 = vshrl.u32 %v1299, 5
    %v1301 = vand.u32 %v1299, 31
    %v1302 = vsub.s32 32, %v1301
    %v1303 = vshrl.u32 683565275, %v1302
    %v1304 = vshll.u32 683565275, %v1301
    %v1305 = vshrl.u32 2475754826, %v1302
    %v1306 = vor.u32 %v1304, %v1305
    %v1307 = vshll.u32 2475754826, %v1301
    %v1308 = vshrl.u32 2131351028, %v1302
    %v1309 = vor.u32 %v1307, %v1308
    %v1310 = vshll.u32 2131351028, %v1301
    %v1311 = vshrl.u32 2102212464, %v1302
    %v1312 = vor.u32 %v1310, %v1311
    %v1313 = vshll.u32 2102212464, %v1301
    %v1314 = vshrl.u32 920167782, %v1302
    %v1315 = vor.u32 %v1313, %v1314
    %v1316 = vshll.u32 920167782, %v1301
    %v1317 = vshrl.u32 1326507024, %v1302
    %v1318 = vor.u32 %v1316, %v1317
    %vm1319 = vcmp.lt.s32.totalorder %v1300, 1
    %vm1320 = vcmp.lt.s32.totalorder %v1300, 2
    %vm1321 = vcmp.lt.s32.totalorder %v1300, 3
    %vm1322 = vcmp.lt.s32.totalorder %v1300, 4
    %v1323 = vsel %vm1319, %v1303, %v1306
    %v1324 = vsel %vm1322, %v1312, 2102212464
    %v1325 = vsel %vm1321, %v1309, %v1324
    %v1326 = vsel %vm1320, %v1323, %v1325
    %v1327 = vsel %vm1319, %v1306, %v1309
    %v1328 = vsel %vm1322, %v1315, 920167782
    %v1329 = vsel %vm1321, %v1312, %v1328
    %v1330 = vsel %vm1320, %v1327, %v1329
    %v1331 = vsel %vm1319, %v1309, %v1312
    %v1332 = vsel %vm1322, %v1318, 1326507024
    %v1333 = vsel %vm1321, %v1315, %v1332
    %v1334 = vsel %vm1320, %v1331, %v1333
    %v1335 = vshll.u32 %v1295, 8
    %v1336 = vmul.u32.u64.compose %v1335, %v1334
    %v1337 = vextract.low.u32 %v1336
    %v1338 = vextract.high.u32 %v1336
    %v1339 = vmul.u32.u64.compose %v1335, %v1330
    %v1340 = vextract.low.u32 %v1339
    %v1341 = vextract.high.u32 %v1339
    %v1342 = vmul.u32 %v1335, %v1326
    %v1343 = vadd.s32 %v1338, %v1340
    %vm1344 = vc.u32 %v1338, %v1340
    %v1345 = vadd.s32 %v1341, 1
    %v1346 = vsel %vm1344, %v1345, %v1341
    %v1347 = vadd.s32 %v1342, %v1346
    %v1348 = vadd.s32 %v1347, 536870912
    %v1349 = vshrl.u32 %v1348, 30
    %v1350 = vshll.u32 %v1349, 30
    %v1351 = vsub.s32 %v1347, %v1350
    %vm1352 = vcmp.lt.s32.totalorder %v1351, 0
    %v1353 = vsub.s32 0, %v1351
    %v1354 = vsel %vm1352, %v1353, %v1351
    %v1355 = vclz %v1354
    %v1356 = vsub.s32 %v1355, 2
    %vm1357 = vcmp.gt.s32.totalorder 0, %v1356
    %v1358 = vsel %vm1357, 0, %v1356
    %v1359 = vsub.s32 32, %v1358
    %v1360 = vshll.u32 %v1351, %v1358
    %v1361 = vshrl.u32 %v1343, %v1359
    %v1362 = vor.u32 %v1360, %v1361
    %v1363 = vsub.s32 4294967266, %v1358
    %v1364 = vadd.s32 %v1363, 127
    %v1365 = vshll.u32 %v1364, 23
    %v1366 = vor.u32 4788187, %v1365
    %v1367 = vand.u32 2147483647, %v1366
    %v1369 = vcvt.s32.f32 %v1362
    %v1370 = vmul.f32 %v1369, %v1367
    %v1371 = vxor.u32 %v1370, 2147483648
    %v1372 = vsel %vm1289, %v1371, %v1370
    %v1373 = vsub.s32 4, %v1349
    %v1374 = vsel %vm1289, %v1373, %v1349
    %v1375 = vsel %vm1288, %v128, %v1372
    %v1376 = vsel %vm1288, 0, %v1374
    %v1377 = vcosq.f32.pop %v1375
    %v1378 = vsinq.f32.pop %v1375
    %vm1379 = vweird.f32 %v128
    %v1380 = vadd.s32 %v1376, 3
    %v1381 = vand.u32 %v1380, 3
    %vm1382 = vcmp.lt.s32.totalorder %v1381, 2
    %vm1383 = vcmp.eq.s32.totalorder %v1381, 0
    %v1384 = vxor.u32 %v1378, 2147483648
    %v1385 = vsel %vm1383, %v1377, %v1384
    %vm1386 = vcmp.eq.s32.totalorder %v1381, 2
    %v1387 = vxor.u32 %v1377, 2147483648
    %v1388 = vsel %vm1386, %v1387, %v1378
    %v1389 = vsel %vm1382, %v1385, %v1388
    %v1390 = vsel %vm1379, nan, %v1389
    %v1391 = vand.u32 2147483647, %v129
    %vm1392 = vcmp.le.f32.partialorder %v1391, 0.7853982
    %vm1393 = vcmp.lt.s32.totalorder %v129, 0
    %v1394 = vand.u32 %v129, 2139095040
    %v1395 = vshrl.u32 %v1394, 23
    %v1396 = vsub.s32 %v1395, 127
    %v1397 = vand.u32 2147483647, %v129
    %v1398 = vand.u32 %v1397, 8388607
    %v1399 = vor.u32 %v1398, 8388608
    %v1400 = vsub.s32 0, %v1399
    %v1401 = vadd.s32 %v1396, 1
    %vm1402 = vcmp.gt.s32.totalorder %v1401, 0
    %v1403 = vsel %vm1402, %v1401, 0
    %v1404 = vshrl.u32 %v1403, 5
    %v1405 = vand.u32 %v1403, 31
    %v1406 = vsub.s32 32, %v1405
    %v1407 = vshrl.u32 683565275, %v1406
    %v1408 = vshll.u32 683565275, %v1405
    %v1409 = vshrl.u32 2475754826, %v1406
    %v1410 = vor.u32 %v1408, %v1409
    %v1411 = vshll.u32 2475754826, %v1405
    %v1412 = vshrl.u32 2131351028, %v1406
    %v1413 = vor.u32 %v1411, %v1412
    %v1414 = vshll.u32 2131351028, %v1405
    %v1415 = vshrl.u32 2102212464, %v1406
    %v1416 = vor.u32 %v1414, %v1415
    %v1417 = vshll.u32 2102212464, %v1405
    %v1418 = vshrl.u32 920167782, %v1406
    %v1419 = vor.u32 %v1417, %v1418
    %v1420 = vshll.u32 920167782, %v1405
    %v1421 = vshrl.u32 1326507024, %v1406
    %v1422 = vor.u32 %v1420, %v1421
    %vm1423 = vcmp.lt.s32.totalorder %v1404, 1
    %vm1424 = vcmp.lt.s32.totalorder %v1404, 2
    %vm1425 = vcmp.lt.s32.totalorder %v1404, 3
    %vm1426 = vcmp.lt.s32.totalorder %v1404, 4
    %v1427 = vsel %vm1423, %v1407, %v1410
    %v1428 = vsel %vm1426, %v1416, 2102212464
    %v1429 = vsel %vm1425, %v1413, %v1428
    %v1430 = vsel %vm1424, %v1427, %v1429
    %v1431 = vsel %vm1423, %v1410, %v1413
    %v1432 = vsel %vm1426, %v1419, 920167782
    %v1433 = vsel %vm1425, %v1416, %v1432
    %v1434 = vsel %vm1424, %v1431, %v1433
    %v1435 = vsel %vm1423, %v1413, %v1416
    %v1436 = vsel %vm1426, %v1422, 1326507024
    %v1437 = vsel %vm1425, %v1419, %v1436
    %v1438 = vsel %vm1424, %v1435, %v1437
    %v1439 = vshll.u32 %v1399, 8
    %v1440 = vmul.u32.u64.compose %v1439, %v1438
    %v1441 = vextract.low.u32 %v1440
    %v1442 = vextract.high.u32 %v1440
    %v1443 = vmul.u32.u64.compose %v1439, %v1434
    %v1444 = vextract.low.u32 %v1443
    %v1445 = vextract.high.u32 %v1443
    %v1446 = vmul.u32 %v1439, %v1430
    %v1447 = vadd.s32 %v1442, %v1444
    %vm1448 = vc.u32 %v1442, %v1444
    %v1449 = vadd.s32 %v1445, 1
    %v1450 = vsel %vm1448, %v1449, %v1445
    %v1451 = vadd.s32 %v1446, %v1450
    %v1452 = vadd.s32 %v1451, 536870912
    %v1453 = vshrl.u32 %v1452, 30
    %v1454 = vshll.u32 %v1453, 30
    %v1455 = vsub.s32 %v1451, %v1454
    %vm1456 = vcmp.lt.s32.totalorder %v1455, 0
    %v1457 = vsub.s32 0, %v1455
    %v1458 = vsel %vm1456, %v1457, %v1455
    %v1459 = vclz %v1458
    %v1460 = vsub.s32 %v1459, 2
    %vm1461 = vcmp.gt.s32.totalorder 0, %v1460
    %v1462 = vsel %vm1461, 0, %v1460
    %v1463 = vsub.s32 32, %v1462
    %v1464 = vshll.u32 %v1455, %v1462
    %v1465 = vshrl.u32 %v1447, %v1463
    %v1466 = vor.u32 %v1464, %v1465
    %v1467 = vsub.s32 4294967266, %v1462
    %v1468 = vadd.s32 %v1467, 127
    %v1469 = vshll.u32 %v1468, 23
    %v1470 = vor.u32 4788187, %v1469
    %v1471 = vand.u32 2147483647, %v1470
    %v1473 = vcvt.s32.f32 %v1466
    %v1474 = vmul.f32 %v1473, %v1471
    %v1475 = vxor.u32 %v1474, 2147483648
    %v1476 = vsel %vm1393, %v1475, %v1474
    %v1477 = vsub.s32 4, %v1453
    %v1478 = vsel %vm1393, %v1477, %v1453
    %v1479 = vsel %vm1392, %v129, %v1476
    %v1480 = vsel %vm1392, 0, %v1478
    %v1481 = vcosq.f32.pop %v1479
    %v1482 = vsinq.f32.pop %v1479
    %vm1483 = vweird.f32 %v129
    %v1484 = vadd.s32 %v1480, 3
    %v1485 = vand.u32 %v1484, 3
    %vm1486 = vcmp.lt.s32.totalorder %v1485, 2
    %vm1487 = vcmp.eq.s32.totalorder %v1485, 0
    %v1488 = vxor.u32 %v1482, 2147483648
    %v1489 = vsel %vm1487, %v1481, %v1488
    %vm1490 = vcmp.eq.s32.totalorder %v1485, 2
    %v1491 = vxor.u32 %v1481, 2147483648
    %v1492 = vsel %vm1490, %v1491, %v1482
    %v1493 = vsel %vm1486, %v1489, %v1492
    %v1494 = vsel %vm1483, nan, %v1493
    %v1495 = vand.u32 2147483647, %v130
    %vm1496 = vcmp.le.f32.partialorder %v1495, 0.7853982
    %vm1497 = vcmp.lt.s32.totalorder %v130, 0
    %v1498 = vand.u32 %v130, 2139095040
    %v1499 = vshrl.u32 %v1498, 23
    %v1500 = vsub.s32 %v1499, 127
    %v1501 = vand.u32 2147483647, %v130
    %v1502 = vand.u32 %v1501, 8388607
    %v1503 = vor.u32 %v1502, 8388608
    %v1504 = vsub.s32 0, %v1503
    %v1505 = vadd.s32 %v1500, 1
    %vm1506 = vcmp.gt.s32.totalorder %v1505, 0
    %v1507 = vsel %vm1506, %v1505, 0
    %v1508 = vshrl.u32 %v1507, 5
    %v1509 = vand.u32 %v1507, 31
    %v1510 = vsub.s32 32, %v1509
    %v1511 = vshrl.u32 683565275, %v1510
    %v1512 = vshll.u32 683565275, %v1509
    %v1513 = vshrl.u32 2475754826, %v1510
    %v1514 = vor.u32 %v1512, %v1513
    %v1515 = vshll.u32 2475754826, %v1509
    %v1516 = vshrl.u32 2131351028, %v1510
    %v1517 = vor.u32 %v1515, %v1516
    %v1518 = vshll.u32 2131351028, %v1509
    %v1519 = vshrl.u32 2102212464, %v1510
    %v1520 = vor.u32 %v1518, %v1519
    %v1521 = vshll.u32 2102212464, %v1509
    %v1522 = vshrl.u32 920167782, %v1510
    %v1523 = vor.u32 %v1521, %v1522
    %v1524 = vshll.u32 920167782, %v1509
    %v1525 = vshrl.u32 1326507024, %v1510
    %v1526 = vor.u32 %v1524, %v1525
    %vm1527 = vcmp.lt.s32.totalorder %v1508, 1
    %vm1528 = vcmp.lt.s32.totalorder %v1508, 2
    %vm1529 = vcmp.lt.s32.totalorder %v1508, 3
    %vm1530 = vcmp.lt.s32.totalorder %v1508, 4
    %v1531 = vsel %vm1527, %v1511, %v1514
    %v1532 = vsel %vm1530, %v1520, 2102212464
    %v1533 = vsel %vm1529, %v1517, %v1532
    %v1534 = vsel %vm1528, %v1531, %v1533
    %v1535 = vsel %vm1527, %v1514, %v1517
    %v1536 = vsel %vm1530, %v1523, 920167782
    %v1537 = vsel %vm1529, %v1520, %v1536
    %v1538 = vsel %vm1528, %v1535, %v1537
    %v1539 = vsel %vm1527, %v1517, %v1520
    %v1540 = vsel %vm1530, %v1526, 1326507024
    %v1541 = vsel %vm1529, %v1523, %v1540
    %v1542 = vsel %vm1528, %v1539, %v1541
    %v1543 = vshll.u32 %v1503, 8
    %v1544 = vmul.u32.u64.compose %v1543, %v1542
    %v1545 = vextract.low.u32 %v1544
    %v1546 = vextract.high.u32 %v1544
    %v1547 = vmul.u32.u64.compose %v1543, %v1538
    %v1548 = vextract.low.u32 %v1547
    %v1549 = vextract.high.u32 %v1547
    %v1550 = vmul.u32 %v1543, %v1534
    %v1551 = vadd.s32 %v1546, %v1548
    %vm1552 = vc.u32 %v1546, %v1548
    %v1553 = vadd.s32 %v1549, 1
    %v1554 = vsel %vm1552, %v1553, %v1549
    %v1555 = vadd.s32 %v1550, %v1554
    %v1556 = vadd.s32 %v1555, 536870912
    %v1557 = vshrl.u32 %v1556, 30
    %v1558 = vshll.u32 %v1557, 30
    %v1559 = vsub.s32 %v1555, %v1558
    %vm1560 = vcmp.lt.s32.totalorder %v1559, 0
    %v1561 = vsub.s32 0, %v1559
    %v1562 = vsel %vm1560, %v1561, %v1559
    %v1563 = vclz %v1562
    %v1564 = vsub.s32 %v1563, 2
    %vm1565 = vcmp.gt.s32.totalorder 0, %v1564
    %v1566 = vsel %vm1565, 0, %v1564
    %v1567 = vsub.s32 32, %v1566
    %v1568 = vshll.u32 %v1559, %v1566
    %v1569 = vshrl.u32 %v1551, %v1567
    %v1570 = vor.u32 %v1568, %v1569
    %v1571 = vsub.s32 4294967266, %v1566
    %v1572 = vadd.s32 %v1571, 127
    %v1573 = vshll.u32 %v1572, 23
    %v1574 = vor.u32 4788187, %v1573
    %v1575 = vand.u32 2147483647, %v1574
    %v1577 = vcvt.s32.f32 %v1570
    %v1578 = vmul.f32 %v1577, %v1575
    %v1579 = vxor.u32 %v1578, 2147483648
    %v1580 = vsel %vm1497, %v1579, %v1578
    %v1581 = vsub.s32 4, %v1557
    %v1582 = vsel %vm1497, %v1581, %v1557
    %v1583 = vsel %vm1496, %v130, %v1580
    %v1584 = vsel %vm1496, 0, %v1582
    %v1585 = vcosq.f32.pop %v1583
    %v1586 = vsinq.f32.pop %v1583
    %vm1587 = vweird.f32 %v130
    %v1588 = vadd.s32 %v1584, 3
    %v1589 = vand.u32 %v1588, 3
    %vm1590 = vcmp.lt.s32.totalorder %v1589, 2
    %vm1591 = vcmp.eq.s32.totalorder %v1589, 0
    %v1592 = vxor.u32 %v1586, 2147483648
    %v1593 = vsel %vm1591, %v1585, %v1592
    %vm1594 = vcmp.eq.s32.totalorder %v1589, 2
    %v1595 = vxor.u32 %v1585, 2147483648
    %v1596 = vsel %vm1594, %v1595, %v1586
    %v1597 = vsel %vm1590, %v1593, %v1596
    %v1598 = vsel %vm1587, nan, %v1597
    %v1599 = vand.u32 2147483647, %v131
    %vm1600 = vcmp.le.f32.partialorder %v1599, 0.7853982
    %vm1601 = vcmp.lt.s32.totalorder %v131, 0
    %v1602 = vand.u32 %v131, 2139095040
    %v1603 = vshrl.u32 %v1602, 23
    %v1604 = vsub.s32 %v1603, 127
    %v1605 = vand.u32 2147483647, %v131
    %v1606 = vand.u32 %v1605, 8388607
    %v1607 = vor.u32 %v1606, 8388608
    %v1608 = vsub.s32 0, %v1607
    %v1609 = vadd.s32 %v1604, 1
    %vm1610 = vcmp.gt.s32.totalorder %v1609, 0
    %v1611 = vsel %vm1610, %v1609, 0
    %v1612 = vshrl.u32 %v1611, 5
    %v1613 = vand.u32 %v1611, 31
    %v1614 = vsub.s32 32, %v1613
    %v1615 = vshrl.u32 683565275, %v1614
    %v1616 = vshll.u32 683565275, %v1613
    %v1617 = vshrl.u32 2475754826, %v1614
    %v1618 = vor.u32 %v1616, %v1617
    %v1619 = vshll.u32 2475754826, %v1613
    %v1620 = vshrl.u32 2131351028, %v1614
    %v1621 = vor.u32 %v1619, %v1620
    %v1622 = vshll.u32 2131351028, %v1613
    %v1623 = vshrl.u32 2102212464, %v1614
    %v1624 = vor.u32 %v1622, %v1623
    %v1625 = vshll.u32 2102212464, %v1613
    %v1626 = vshrl.u32 920167782, %v1614
    %v1627 = vor.u32 %v1625, %v1626
    %v1628 = vshll.u32 920167782, %v1613
    %v1629 = vshrl.u32 1326507024, %v1614
    %v1630 = vor.u32 %v1628, %v1629
    %vm1631 = vcmp.lt.s32.totalorder %v1612, 1
    %vm1632 = vcmp.lt.s32.totalorder %v1612, 2
    %vm1633 = vcmp.lt.s32.totalorder %v1612, 3
    %vm1634 = vcmp.lt.s32.totalorder %v1612, 4
    %v1635 = vsel %vm1631, %v1615, %v1618
    %v1636 = vsel %vm1634, %v1624, 2102212464
    %v1637 = vsel %vm1633, %v1621, %v1636
    %v1638 = vsel %vm1632, %v1635, %v1637
    %v1639 = vsel %vm1631, %v1618, %v1621
    %v1640 = vsel %vm1634, %v1627, 920167782
    %v1641 = vsel %vm1633, %v1624, %v1640
    %v1642 = vsel %vm1632, %v1639, %v1641
    %v1643 = vsel %vm1631, %v1621, %v1624
    %v1644 = vsel %vm1634, %v1630, 1326507024
    %v1645 = vsel %vm1633, %v1627, %v1644
    %v1646 = vsel %vm1632, %v1643, %v1645
    %v1647 = vshll.u32 %v1607, 8
    %v1648 = vmul.u32.u64.compose %v1647, %v1646
    %v1649 = vextract.low.u32 %v1648
    %v1650 = vextract.high.u32 %v1648
    %v1651 = vmul.u32.u64.compose %v1647, %v1642
    %v1652 = vextract.low.u32 %v1651
    %v1653 = vextract.high.u32 %v1651
    %v1654 = vmul.u32 %v1647, %v1638
    %v1655 = vadd.s32 %v1650, %v1652
    %vm1656 = vc.u32 %v1650, %v1652
    %v1657 = vadd.s32 %v1653, 1
    %v1658 = vsel %vm1656, %v1657, %v1653
    %v1659 = vadd.s32 %v1654, %v1658
    %v1660 = vadd.s32 %v1659, 536870912
    %v1661 = vshrl.u32 %v1660, 30
    %v1662 = vshll.u32 %v1661, 30
    %v1663 = vsub.s32 %v1659, %v1662
    %vm1664 = vcmp.lt.s32.totalorder %v1663, 0
    %v1665 = vsub.s32 0, %v1663
    %v1666 = vsel %vm1664, %v1665, %v1663
    %v1667 = vclz %v1666
    %v1668 = vsub.s32 %v1667, 2
    %vm1669 = vcmp.gt.s32.totalorder 0, %v1668
    %v1670 = vsel %vm1669, 0, %v1668
    %v1671 = vsub.s32 32, %v1670
    %v1672 = vshll.u32 %v1663, %v1670
    %v1673 = vshrl.u32 %v1655, %v1671
    %v1674 = vor.u32 %v1672, %v1673
    %v1675 = vsub.s32 4294967266, %v1670
    %v1676 = vadd.s32 %v1675, 127
    %v1677 = vshll.u32 %v1676, 23
    %v1678 = vor.u32 4788187, %v1677
    %v1679 = vand.u32 2147483647, %v1678
    %v1681 = vcvt.s32.f32 %v1674
    %v1682 = vmul.f32 %v1681, %v1679
    %v1683 = vxor.u32 %v1682, 2147483648
    %v1684 = vsel %vm1601, %v1683, %v1682
    %v1685 = vsub.s32 4, %v1661
    %v1686 = vsel %vm1601, %v1685, %v1661
    %v1687 = vsel %vm1600, %v131, %v1684
    %v1688 = vsel %vm1600, 0, %v1686
    %v1689 = vcosq.f32.pop %v1687
    %v1690 = vsinq.f32.pop %v1687
    %vm1691 = vweird.f32 %v131
    %v1692 = vadd.s32 %v1688, 3
    %v1693 = vand.u32 %v1692, 3
    %vm1694 = vcmp.lt.s32.totalorder %v1693, 2
    %vm1695 = vcmp.eq.s32.totalorder %v1693, 0
    %v1696 = vxor.u32 %v1690, 2147483648
    %v1697 = vsel %vm1695, %v1689, %v1696
    %vm1698 = vcmp.eq.s32.totalorder %v1693, 2
    %v1699 = vxor.u32 %v1689, 2147483648
    %v1700 = vsel %vm1698, %v1699, %v1690
    %v1701 = vsel %vm1694, %v1697, %v1700
    %v1702 = vsel %vm1691, nan, %v1701
    %v1703 = vand.u32 2147483647, %v132
    %vm1704 = vcmp.le.f32.partialorder %v1703, 0.7853982
    %vm1705 = vcmp.lt.s32.totalorder %v132, 0
    %v1706 = vand.u32 %v132, 2139095040
    %v1707 = vshrl.u32 %v1706, 23
    %v1708 = vsub.s32 %v1707, 127
    %v1709 = vand.u32 2147483647, %v132
    %v1710 = vand.u32 %v1709, 8388607
    %v1711 = vor.u32 %v1710, 8388608
    %v1712 = vsub.s32 0, %v1711
    %v1713 = vadd.s32 %v1708, 1
    %vm1714 = vcmp.gt.s32.totalorder %v1713, 0
    %v1715 = vsel %vm1714, %v1713, 0
    %v1716 = vshrl.u32 %v1715, 5
    %v1717 = vand.u32 %v1715, 31
    %v1718 = vsub.s32 32, %v1717
    %v1719 = vshrl.u32 683565275, %v1718
    %v1720 = vshll.u32 683565275, %v1717
    %v1721 = vshrl.u32 2475754826, %v1718
    %v1722 = vor.u32 %v1720, %v1721
    %v1723 = vshll.u32 2475754826, %v1717
    %v1724 = vshrl.u32 2131351028, %v1718
    %v1725 = vor.u32 %v1723, %v1724
    %v1726 = vshll.u32 2131351028, %v1717
    %v1727 = vshrl.u32 2102212464, %v1718
    %v1728 = vor.u32 %v1726, %v1727
    %v1729 = vshll.u32 2102212464, %v1717
    %v1730 = vshrl.u32 920167782, %v1718
    %v1731 = vor.u32 %v1729, %v1730
    %v1732 = vshll.u32 920167782, %v1717
    %v1733 = vshrl.u32 1326507024, %v1718
    %v1734 = vor.u32 %v1732, %v1733
    %vm1735 = vcmp.lt.s32.totalorder %v1716, 1
    %vm1736 = vcmp.lt.s32.totalorder %v1716, 2
    %vm1737 = vcmp.lt.s32.totalorder %v1716, 3
    %vm1738 = vcmp.lt.s32.totalorder %v1716, 4
    %v1739 = vsel %vm1735, %v1719, %v1722
    %v1740 = vsel %vm1738, %v1728, 2102212464
    %v1741 = vsel %vm1737, %v1725, %v1740
    %v1742 = vsel %vm1736, %v1739, %v1741
    %v1743 = vsel %vm1735, %v1722, %v1725
    %v1744 = vsel %vm1738, %v1731, 920167782
    %v1745 = vsel %vm1737, %v1728, %v1744
    %v1746 = vsel %vm1736, %v1743, %v1745
    %v1747 = vsel %vm1735, %v1725, %v1728
    %v1748 = vsel %vm1738, %v1734, 1326507024
    %v1749 = vsel %vm1737, %v1731, %v1748
    %v1750 = vsel %vm1736, %v1747, %v1749
    %v1751 = vshll.u32 %v1711, 8
    %v1752 = vmul.u32.u64.compose %v1751, %v1750
    %v1753 = vextract.low.u32 %v1752
    %v1754 = vextract.high.u32 %v1752
    %v1755 = vmul.u32.u64.compose %v1751, %v1746
    %v1756 = vextract.low.u32 %v1755
    %v1757 = vextract.high.u32 %v1755
    %v1758 = vmul.u32 %v1751, %v1742
    %v1759 = vadd.s32 %v1754, %v1756
    %vm1760 = vc.u32 %v1754, %v1756
    %v1761 = vadd.s32 %v1757, 1
    %v1762 = vsel %vm1760, %v1761, %v1757
    %v1763 = vadd.s32 %v1758, %v1762
    %v1764 = vadd.s32 %v1763, 536870912
    %v1765 = vshrl.u32 %v1764, 30
    %v1766 = vshll.u32 %v1765, 30
    %v1767 = vsub.s32 %v1763, %v1766
    %vm1768 = vcmp.lt.s32.totalorder %v1767, 0
    %v1769 = vsub.s32 0, %v1767
    %v1770 = vsel %vm1768, %v1769, %v1767
    %v1771 = vclz %v1770
    %v1772 = vsub.s32 %v1771, 2
    %vm1773 = vcmp.gt.s32.totalorder 0, %v1772
    %v1774 = vsel %vm1773, 0, %v1772
    %v1775 = vsub.s32 32, %v1774
    %v1776 = vshll.u32 %v1767, %v1774
    %v1777 = vshrl.u32 %v1759, %v1775
    %v1778 = vor.u32 %v1776, %v1777
    %v1779 = vsub.s32 4294967266, %v1774
    %v1780 = vadd.s32 %v1779, 127
    %v1781 = vshll.u32 %v1780, 23
    %v1782 = vor.u32 4788187, %v1781
    %v1783 = vand.u32 2147483647, %v1782
    %v1785 = vcvt.s32.f32 %v1778
    %v1786 = vmul.f32 %v1785, %v1783
    %v1787 = vxor.u32 %v1786, 2147483648
    %v1788 = vsel %vm1705, %v1787, %v1786
    %v1789 = vsub.s32 4, %v1765
    %v1790 = vsel %vm1705, %v1789, %v1765
    %v1791 = vsel %vm1704, %v132, %v1788
    %v1792 = vsel %vm1704, 0, %v1790
    %v1793 = vcosq.f32.pop %v1791
    %v1794 = vsinq.f32.pop %v1791
    %vm1795 = vweird.f32 %v132
    %v1796 = vadd.s32 %v1792, 3
    %v1797 = vand.u32 %v1796, 3
    %vm1798 = vcmp.lt.s32.totalorder %v1797, 2
    %vm1799 = vcmp.eq.s32.totalorder %v1797, 0
    %v1800 = vxor.u32 %v1794, 2147483648
    %v1801 = vsel %vm1799, %v1793, %v1800
    %vm1802 = vcmp.eq.s32.totalorder %v1797, 2
    %v1803 = vxor.u32 %v1793, 2147483648
    %v1804 = vsel %vm1802, %v1803, %v1794
    %v1805 = vsel %vm1798, %v1801, %v1804
    %v1806 = vsel %vm1795, nan, %v1805
    %v1807 = vand.u32 2147483647, %v133
    %vm1808 = vcmp.le.f32.partialorder %v1807, 0.7853982
    %vm1809 = vcmp.lt.s32.totalorder %v133, 0
    %v1810 = vand.u32 %v133, 2139095040
    %v1811 = vshrl.u32 %v1810, 23
    %v1812 = vsub.s32 %v1811, 127
    %v1813 = vand.u32 2147483647, %v133
    %v1814 = vand.u32 %v1813, 8388607
    %v1815 = vor.u32 %v1814, 8388608
    %v1816 = vsub.s32 0, %v1815
    %v1817 = vadd.s32 %v1812, 1
    %vm1818 = vcmp.gt.s32.totalorder %v1817, 0
    %v1819 = vsel %vm1818, %v1817, 0
    %v1820 = vshrl.u32 %v1819, 5
    %v1821 = vand.u32 %v1819, 31
    %v1822 = vsub.s32 32, %v1821
    %v1823 = vshrl.u32 683565275, %v1822
    %v1824 = vshll.u32 683565275, %v1821
    %v1825 = vshrl.u32 2475754826, %v1822
    %v1826 = vor.u32 %v1824, %v1825
    %v1827 = vshll.u32 2475754826, %v1821
    %v1828 = vshrl.u32 2131351028, %v1822
    %v1829 = vor.u32 %v1827, %v1828
    %v1830 = vshll.u32 2131351028, %v1821
    %v1831 = vshrl.u32 2102212464, %v1822
    %v1832 = vor.u32 %v1830, %v1831
    %v1833 = vshll.u32 2102212464, %v1821
    %v1834 = vshrl.u32 920167782, %v1822
    %v1835 = vor.u32 %v1833, %v1834
    %v1836 = vshll.u32 920167782, %v1821
    %v1837 = vshrl.u32 1326507024, %v1822
    %v1838 = vor.u32 %v1836, %v1837
    %vm1839 = vcmp.lt.s32.totalorder %v1820, 1
    %vm1840 = vcmp.lt.s32.totalorder %v1820, 2
    %vm1841 = vcmp.lt.s32.totalorder %v1820, 3
    %vm1842 = vcmp.lt.s32.totalorder %v1820, 4
    %v1843 = vsel %vm1839, %v1823, %v1826
    %v1844 = vsel %vm1842, %v1832, 2102212464
    %v1845 = vsel %vm1841, %v1829, %v1844
    %v1846 = vsel %vm1840, %v1843, %v1845
    %v1847 = vsel %vm1839, %v1826, %v1829
    %v1848 = vsel %vm1842, %v1835, 920167782
    %v1849 = vsel %vm1841, %v1832, %v1848
    %v1850 = vsel %vm1840, %v1847, %v1849
    %v1851 = vsel %vm1839, %v1829, %v1832
    %v1852 = vsel %vm1842, %v1838, 1326507024
    %v1853 = vsel %vm1841, %v1835, %v1852
    %v1854 = vsel %vm1840, %v1851, %v1853
    %v1855 = vshll.u32 %v1815, 8
    %v1856 = vmul.u32.u64.compose %v1855, %v1854
    %v1857 = vextract.low.u32 %v1856
    %v1858 = vextract.high.u32 %v1856
    %v1859 = vmul.u32.u64.compose %v1855, %v1850
    %v1860 = vextract.low.u32 %v1859
    %v1861 = vextract.high.u32 %v1859
    %v1862 = vmul.u32 %v1855, %v1846
    %v1863 = vadd.s32 %v1858, %v1860
    %vm1864 = vc.u32 %v1858, %v1860
    %v1865 = vadd.s32 %v1861, 1
    %v1866 = vsel %vm1864, %v1865, %v1861
    %v1867 = vadd.s32 %v1862, %v1866
    %v1868 = vadd.s32 %v1867, 536870912
    %v1869 = vshrl.u32 %v1868, 30
    %v1870 = vshll.u32 %v1869, 30
    %v1871 = vsub.s32 %v1867, %v1870
    %vm1872 = vcmp.lt.s32.totalorder %v1871, 0
    %v1873 = vsub.s32 0, %v1871
    %v1874 = vsel %vm1872, %v1873, %v1871
    %v1875 = vclz %v1874
    %v1876 = vsub.s32 %v1875, 2
    %vm1877 = vcmp.gt.s32.totalorder 0, %v1876
    %v1878 = vsel %vm1877, 0, %v1876
    %v1879 = vsub.s32 32, %v1878
    %v1880 = vshll.u32 %v1871, %v1878
    %v1881 = vshrl.u32 %v1863, %v1879
    %v1882 = vor.u32 %v1880, %v1881
    %v1883 = vsub.s32 4294967266, %v1878
    %v1884 = vadd.s32 %v1883, 127
    %v1885 = vshll.u32 %v1884, 23
    %v1886 = vor.u32 4788187, %v1885
    %v1887 = vand.u32 2147483647, %v1886
    %v1889 = vcvt.s32.f32 %v1882
    %v1890 = vmul.f32 %v1889, %v1887
    %v1891 = vxor.u32 %v1890, 2147483648
    %v1892 = vsel %vm1809, %v1891, %v1890
    %v1893 = vsub.s32 4, %v1869
    %v1894 = vsel %vm1809, %v1893, %v1869
    %v1895 = vsel %vm1808, %v133, %v1892
    %v1896 = vsel %vm1808, 0, %v1894
    %v1897 = vcosq.f32.pop %v1895
    %v1898 = vsinq.f32.pop %v1895
    %vm1899 = vweird.f32 %v133
    %v1900 = vadd.s32 %v1896, 3
    %v1901 = vand.u32 %v1900, 3
    %vm1902 = vcmp.lt.s32.totalorder %v1901, 2
    %vm1903 = vcmp.eq.s32.totalorder %v1901, 0
    %v1904 = vxor.u32 %v1898, 2147483648
    %v1905 = vsel %vm1903, %v1897, %v1904
    %vm1906 = vcmp.eq.s32.totalorder %v1901, 2
    %v1907 = vxor.u32 %v1897, 2147483648
    %v1908 = vsel %vm1906, %v1907, %v1898
    %v1909 = vsel %vm1902, %v1905, %v1908
    %v1910 = vsel %vm1899, nan, %v1909
    %v1911 = vand.u32 2147483647, %v134
    %vm1912 = vcmp.le.f32.partialorder %v1911, 0.7853982
    %vm1913 = vcmp.lt.s32.totalorder %v134, 0
    %v1914 = vand.u32 %v134, 2139095040
    %v1915 = vshrl.u32 %v1914, 23
    %v1916 = vsub.s32 %v1915, 127
    %v1917 = vand.u32 2147483647, %v134
    %v1918 = vand.u32 %v1917, 8388607
    %v1919 = vor.u32 %v1918, 8388608
    %v1920 = vsub.s32 0, %v1919
    %v1921 = vadd.s32 %v1916, 1
    %vm1922 = vcmp.gt.s32.totalorder %v1921, 0
    %v1923 = vsel %vm1922, %v1921, 0
    %v1924 = vshrl.u32 %v1923, 5
    %v1925 = vand.u32 %v1923, 31
    %v1926 = vsub.s32 32, %v1925
    %v1927 = vshrl.u32 683565275, %v1926
    %v1928 = vshll.u32 683565275, %v1925
    %v1929 = vshrl.u32 2475754826, %v1926
    %v1930 = vor.u32 %v1928, %v1929
    %v1931 = vshll.u32 2475754826, %v1925
    %v1932 = vshrl.u32 2131351028, %v1926
    %v1933 = vor.u32 %v1931, %v1932
    %v1934 = vshll.u32 2131351028, %v1925
    %v1935 = vshrl.u32 2102212464, %v1926
    %v1936 = vor.u32 %v1934, %v1935
    %v1937 = vshll.u32 2102212464, %v1925
    %v1938 = vshrl.u32 920167782, %v1926
    %v1939 = vor.u32 %v1937, %v1938
    %v1940 = vshll.u32 920167782, %v1925
    %v1941 = vshrl.u32 1326507024, %v1926
    %v1942 = vor.u32 %v1940, %v1941
    %vm1943 = vcmp.lt.s32.totalorder %v1924, 1
    %vm1944 = vcmp.lt.s32.totalorder %v1924, 2
    %vm1945 = vcmp.lt.s32.totalorder %v1924, 3
    %vm1946 = vcmp.lt.s32.totalorder %v1924, 4
    %v1947 = vsel %vm1943, %v1927, %v1930
    %v1948 = vsel %vm1946, %v1936, 2102212464
    %v1949 = vsel %vm1945, %v1933, %v1948
    %v1950 = vsel %vm1944, %v1947, %v1949
    %v1951 = vsel %vm1943, %v1930, %v1933
    %v1952 = vsel %vm1946, %v1939, 920167782
    %v1953 = vsel %vm1945, %v1936, %v1952
    %v1954 = vsel %vm1944, %v1951, %v1953
    %v1955 = vsel %vm1943, %v1933, %v1936
    %v1956 = vsel %vm1946, %v1942, 1326507024
    %v1957 = vsel %vm1945, %v1939, %v1956
    %v1958 = vsel %vm1944, %v1955, %v1957
    %v1959 = vshll.u32 %v1919, 8
    %v1960 = vmul.u32.u64.compose %v1959, %v1958
    %v1961 = vextract.low.u32 %v1960
    %v1962 = vextract.high.u32 %v1960
    %v1963 = vmul.u32.u64.compose %v1959, %v1954
    %v1964 = vextract.low.u32 %v1963
    %v1965 = vextract.high.u32 %v1963
    %v1966 = vmul.u32 %v1959, %v1950
    %v1967 = vadd.s32 %v1962, %v1964
    %vm1968 = vc.u32 %v1962, %v1964
    %v1969 = vadd.s32 %v1965, 1
    %v1970 = vsel %vm1968, %v1969, %v1965
    %v1971 = vadd.s32 %v1966, %v1970
    %v1972 = vadd.s32 %v1971, 536870912
    %v1973 = vshrl.u32 %v1972, 30
    %v1974 = vshll.u32 %v1973, 30
    %v1975 = vsub.s32 %v1971, %v1974
    %vm1976 = vcmp.lt.s32.totalorder %v1975, 0
    %v1977 = vsub.s32 0, %v1975
    %v1978 = vsel %vm1976, %v1977, %v1975
    %v1979 = vclz %v1978
    %v1980 = vsub.s32 %v1979, 2
    %vm1981 = vcmp.gt.s32.totalorder 0, %v1980
    %v1982 = vsel %vm1981, 0, %v1980
    %v1983 = vsub.s32 32, %v1982
    %v1984 = vshll.u32 %v1975, %v1982
    %v1985 = vshrl.u32 %v1967, %v1983
    %v1986 = vor.u32 %v1984, %v1985
    %v1987 = vsub.s32 4294967266, %v1982
    %v1988 = vadd.s32 %v1987, 127
    %v1989 = vshll.u32 %v1988, 23
    %v1990 = vor.u32 4788187, %v1989
    %v1991 = vand.u32 2147483647, %v1990
    %v1993 = vcvt.s32.f32 %v1986
    %v1994 = vmul.f32 %v1993, %v1991
    %v1995 = vxor.u32 %v1994, 2147483648
    %v1996 = vsel %vm1913, %v1995, %v1994
    %v1997 = vsub.s32 4, %v1973
    %v1998 = vsel %vm1913, %v1997, %v1973
    %v1999 = vsel %vm1912, %v134, %v1996
    %v2000 = vsel %vm1912, 0, %v1998
    %v2001 = vcosq.f32.pop %v1999
    %v2002 = vsinq.f32.pop %v1999
    %vm2003 = vweird.f32 %v134
    %v2004 = vadd.s32 %v2000, 3
    %v2005 = vand.u32 %v2004, 3
    %vm2006 = vcmp.lt.s32.totalorder %v2005, 2
    %vm2007 = vcmp.eq.s32.totalorder %v2005, 0
    %v2008 = vxor.u32 %v2002, 2147483648
    %v2009 = vsel %vm2007, %v2001, %v2008
    %vm2010 = vcmp.eq.s32.totalorder %v2005, 2
    %v2011 = vxor.u32 %v2001, 2147483648
    %v2012 = vsel %vm2010, %v2011, %v2002
    %v2013 = vsel %vm2006, %v2009, %v2012
    %v2014 = vsel %vm2003, nan, %v2013
    %v2015 = vand.u32 2147483647, %v135
    %vm2016 = vcmp.le.f32.partialorder %v2015, 0.7853982
    %vm2017 = vcmp.lt.s32.totalorder %v135, 0
    %v2018 = vand.u32 %v135, 2139095040
    %v2019 = vshrl.u32 %v2018, 23
    %v2020 = vsub.s32 %v2019, 127
    %v2021 = vand.u32 2147483647, %v135
    %v2022 = vand.u32 %v2021, 8388607
    %v2023 = vor.u32 %v2022, 8388608
    %v2024 = vsub.s32 0, %v2023
    %v2025 = vadd.s32 %v2020, 1
    %vm2026 = vcmp.gt.s32.totalorder %v2025, 0
    %v2027 = vsel %vm2026, %v2025, 0
    %v2028 = vshrl.u32 %v2027, 5
    %v2029 = vand.u32 %v2027, 31
    %v2030 = vsub.s32 32, %v2029
    %v2031 = vshrl.u32 683565275, %v2030
    %v2032 = vshll.u32 683565275, %v2029
    %v2033 = vshrl.u32 2475754826, %v2030
    %v2034 = vor.u32 %v2032, %v2033
    %v2035 = vshll.u32 2475754826, %v2029
    %v2036 = vshrl.u32 2131351028, %v2030
    %v2037 = vor.u32 %v2035, %v2036
    %v2038 = vshll.u32 2131351028, %v2029
    %v2039 = vshrl.u32 2102212464, %v2030
    %v2040 = vor.u32 %v2038, %v2039
    %v2041 = vshll.u32 2102212464, %v2029
    %v2042 = vshrl.u32 920167782, %v2030
    %v2043 = vor.u32 %v2041, %v2042
    %v2044 = vshll.u32 920167782, %v2029
    %v2045 = vshrl.u32 1326507024, %v2030
    %v2046 = vor.u32 %v2044, %v2045
    %vm2047 = vcmp.lt.s32.totalorder %v2028, 1
    %vm2048 = vcmp.lt.s32.totalorder %v2028, 2
    %vm2049 = vcmp.lt.s32.totalorder %v2028, 3
    %vm2050 = vcmp.lt.s32.totalorder %v2028, 4
    %v2051 = vsel %vm2047, %v2031, %v2034
    %v2052 = vsel %vm2050, %v2040, 2102212464
    %v2053 = vsel %vm2049, %v2037, %v2052
    %v2054 = vsel %vm2048, %v2051, %v2053
    %v2055 = vsel %vm2047, %v2034, %v2037
    %v2056 = vsel %vm2050, %v2043, 920167782
    %v2057 = vsel %vm2049, %v2040, %v2056
    %v2058 = vsel %vm2048, %v2055, %v2057
    %v2059 = vsel %vm2047, %v2037, %v2040
    %v2060 = vsel %vm2050, %v2046, 1326507024
    %v2061 = vsel %vm2049, %v2043, %v2060
    %v2062 = vsel %vm2048, %v2059, %v2061
    %v2063 = vshll.u32 %v2023, 8
    %v2064 = vmul.u32.u64.compose %v2063, %v2062
    %v2065 = vextract.low.u32 %v2064
    %v2066 = vextract.high.u32 %v2064
    %v2067 = vmul.u32.u64.compose %v2063, %v2058
    %v2068 = vextract.low.u32 %v2067
    %v2069 = vextract.high.u32 %v2067
    %v2070 = vmul.u32 %v2063, %v2054
    %v2071 = vadd.s32 %v2066, %v2068
    %vm2072 = vc.u32 %v2066, %v2068
    %v2073 = vadd.s32 %v2069, 1
    %v2074 = vsel %vm2072, %v2073, %v2069
    %v2075 = vadd.s32 %v2070, %v2074
    %v2076 = vadd.s32 %v2075, 536870912
    %v2077 = vshrl.u32 %v2076, 30
    %v2078 = vshll.u32 %v2077, 30
    %v2079 = vsub.s32 %v2075, %v2078
    %vm2080 = vcmp.lt.s32.totalorder %v2079, 0
    %v2081 = vsub.s32 0, %v2079
    %v2082 = vsel %vm2080, %v2081, %v2079
    %v2083 = vclz %v2082
    %v2084 = vsub.s32 %v2083, 2
    %vm2085 = vcmp.gt.s32.totalorder 0, %v2084
    %v2086 = vsel %vm2085, 0, %v2084
    %v2087 = vsub.s32 32, %v2086
    %v2088 = vshll.u32 %v2079, %v2086
    %v2089 = vshrl.u32 %v2071, %v2087
    %v2090 = vor.u32 %v2088, %v2089
    %v2091 = vsub.s32 4294967266, %v2086
    %v2092 = vadd.s32 %v2091, 127
    %v2093 = vshll.u32 %v2092, 23
    %v2094 = vor.u32 4788187, %v2093
    %v2095 = vand.u32 2147483647, %v2094
    %v2097 = vcvt.s32.f32 %v2090
    %v2098 = vmul.f32 %v2097, %v2095
    %v2099 = vxor.u32 %v2098, 2147483648
    %v2100 = vsel %vm2017, %v2099, %v2098
    %v2101 = vsub.s32 4, %v2077
    %v2102 = vsel %vm2017, %v2101, %v2077
    %v2103 = vsel %vm2016, %v135, %v2100
    %v2104 = vsel %vm2016, 0, %v2102
    %v2105 = vcosq.f32.pop %v2103
    %v2106 = vsinq.f32.pop %v2103
    %vm2107 = vweird.f32 %v135
    %v2108 = vadd.s32 %v2104, 3
    %v2109 = vand.u32 %v2108, 3
    %vm2110 = vcmp.lt.s32.totalorder %v2109, 2
    %vm2111 = vcmp.eq.s32.totalorder %v2109, 0
    %v2112 = vxor.u32 %v2106, 2147483648
    %v2113 = vsel %vm2111, %v2105, %v2112
    %vm2114 = vcmp.eq.s32.totalorder %v2109, 2
    %v2115 = vxor.u32 %v2105, 2147483648
    %v2116 = vsel %vm2114, %v2115, %v2106
    %v2117 = vsel %vm2110, %v2113, %v2116
    %v2118 = vsel %vm2107, nan, %v2117
    %v2119 = vand.u32 2147483647, %v136
    %vm2120 = vcmp.le.f32.partialorder %v2119, 0.7853982
    %vm2121 = vcmp.lt.s32.totalorder %v136, 0
    %v2122 = vand.u32 %v136, 2139095040
    %v2123 = vshrl.u32 %v2122, 23
    %v2124 = vsub.s32 %v2123, 127
    %v2125 = vand.u32 2147483647, %v136
    %v2126 = vand.u32 %v2125, 8388607
    %v2127 = vor.u32 %v2126, 8388608
    %v2128 = vsub.s32 0, %v2127
    %v2129 = vadd.s32 %v2124, 1
    %vm2130 = vcmp.gt.s32.totalorder %v2129, 0
    %v2131 = vsel %vm2130, %v2129, 0
    %v2132 = vshrl.u32 %v2131, 5
    %v2133 = vand.u32 %v2131, 31
    %v2134 = vsub.s32 32, %v2133
    %v2135 = vshrl.u32 683565275, %v2134
    %v2136 = vshll.u32 683565275, %v2133
    %v2137 = vshrl.u32 2475754826, %v2134
    %v2138 = vor.u32 %v2136, %v2137
    %v2139 = vshll.u32 2475754826, %v2133
    %v2140 = vshrl.u32 2131351028, %v2134
    %v2141 = vor.u32 %v2139, %v2140
    %v2142 = vshll.u32 2131351028, %v2133
    %v2143 = vshrl.u32 2102212464, %v2134
    %v2144 = vor.u32 %v2142, %v2143
    %v2145 = vshll.u32 2102212464, %v2133
    %v2146 = vshrl.u32 920167782, %v2134
    %v2147 = vor.u32 %v2145, %v2146
    %v2148 = vshll.u32 920167782, %v2133
    %v2149 = vshrl.u32 1326507024, %v2134
    %v2150 = vor.u32 %v2148, %v2149
    %vm2151 = vcmp.lt.s32.totalorder %v2132, 1
    %vm2152 = vcmp.lt.s32.totalorder %v2132, 2
    %vm2153 = vcmp.lt.s32.totalorder %v2132, 3
    %vm2154 = vcmp.lt.s32.totalorder %v2132, 4
    %v2155 = vsel %vm2151, %v2135, %v2138
    %v2156 = vsel %vm2154, %v2144, 2102212464
    %v2157 = vsel %vm2153, %v2141, %v2156
    %v2158 = vsel %vm2152, %v2155, %v2157
    %v2159 = vsel %vm2151, %v2138, %v2141
    %v2160 = vsel %vm2154, %v2147, 920167782
    %v2161 = vsel %vm2153, %v2144, %v2160
    %v2162 = vsel %vm2152, %v2159, %v2161
    %v2163 = vsel %vm2151, %v2141, %v2144
    %v2164 = vsel %vm2154, %v2150, 1326507024
    %v2165 = vsel %vm2153, %v2147, %v2164
    %v2166 = vsel %vm2152, %v2163, %v2165
    %v2167 = vshll.u32 %v2127, 8
    %v2168 = vmul.u32.u64.compose %v2167, %v2166
    %v2169 = vextract.low.u32 %v2168
    %v2170 = vextract.high.u32 %v2168
    %v2171 = vmul.u32.u64.compose %v2167, %v2162
    %v2172 = vextract.low.u32 %v2171
    %v2173 = vextract.high.u32 %v2171
    %v2174 = vmul.u32 %v2167, %v2158
    %v2175 = vadd.s32 %v2170, %v2172
    %vm2176 = vc.u32 %v2170, %v2172
    %v2177 = vadd.s32 %v2173, 1
    %v2178 = vsel %vm2176, %v2177, %v2173
    %v2179 = vadd.s32 %v2174, %v2178
    %v2180 = vadd.s32 %v2179, 536870912
    %v2181 = vshrl.u32 %v2180, 30
    %v2182 = vshll.u32 %v2181, 30
    %v2183 = vsub.s32 %v2179, %v2182
    %vm2184 = vcmp.lt.s32.totalorder %v2183, 0
    %v2185 = vsub.s32 0, %v2183
    %v2186 = vsel %vm2184, %v2185, %v2183
    %v2187 = vclz %v2186
    %v2188 = vsub.s32 %v2187, 2
    %vm2189 = vcmp.gt.s32.totalorder 0, %v2188
    %v2190 = vsel %vm2189, 0, %v2188
    %v2191 = vsub.s32 32, %v2190
    %v2192 = vshll.u32 %v2183, %v2190
    %v2193 = vshrl.u32 %v2175, %v2191
    %v2194 = vor.u32 %v2192, %v2193
    %v2195 = vsub.s32 4294967266, %v2190
    %v2196 = vadd.s32 %v2195, 127
    %v2197 = vshll.u32 %v2196, 23
    %v2198 = vor.u32 4788187, %v2197
    %v2199 = vand.u32 2147483647, %v2198
    %v2201 = vcvt.s32.f32 %v2194
    %v2202 = vmul.f32 %v2201, %v2199
    %v2203 = vxor.u32 %v2202, 2147483648
    %v2204 = vsel %vm2121, %v2203, %v2202
    %v2205 = vsub.s32 4, %v2181
    %v2206 = vsel %vm2121, %v2205, %v2181
    %v2207 = vsel %vm2120, %v136, %v2204
    %v2208 = vsel %vm2120, 0, %v2206
    %v2209 = vcosq.f32.pop %v2207
    %v2210 = vsinq.f32.pop %v2207
    %vm2211 = vweird.f32 %v136
    %v2212 = vadd.s32 %v2208, 3
    %v2213 = vand.u32 %v2212, 3
    %vm2214 = vcmp.lt.s32.totalorder %v2213, 2
    %vm2215 = vcmp.eq.s32.totalorder %v2213, 0
    %v2216 = vxor.u32 %v2210, 2147483648
    %v2217 = vsel %vm2215, %v2209, %v2216
    %vm2218 = vcmp.eq.s32.totalorder %v2213, 2
    %v2219 = vxor.u32 %v2209, 2147483648
    %v2220 = vsel %vm2218, %v2219, %v2210
    %v2221 = vsel %vm2214, %v2217, %v2220
    %v2222 = vsel %vm2211, nan, %v2221
    %v2223 = vand.u32 2147483647, %v137
    %vm2224 = vcmp.le.f32.partialorder %v2223, 0.7853982
    %vm2225 = vcmp.lt.s32.totalorder %v137, 0
    %v2226 = vand.u32 %v137, 2139095040
    %v2227 = vshrl.u32 %v2226, 23
    %v2228 = vsub.s32 %v2227, 127
    %v2229 = vand.u32 2147483647, %v137
    %v2230 = vand.u32 %v2229, 8388607
    %v2231 = vor.u32 %v2230, 8388608
    %v2232 = vsub.s32 0, %v2231
    %v2233 = vadd.s32 %v2228, 1
    %vm2234 = vcmp.gt.s32.totalorder %v2233, 0
    %v2235 = vsel %vm2234, %v2233, 0
    %v2236 = vshrl.u32 %v2235, 5
    %v2237 = vand.u32 %v2235, 31
    %v2238 = vsub.s32 32, %v2237
    %v2239 = vshrl.u32 683565275, %v2238
    %v2240 = vshll.u32 683565275, %v2237
    %v2241 = vshrl.u32 2475754826, %v2238
    %v2242 = vor.u32 %v2240, %v2241
    %v2243 = vshll.u32 2475754826, %v2237
    %v2244 = vshrl.u32 2131351028, %v2238
    %v2245 = vor.u32 %v2243, %v2244
    %v2246 = vshll.u32 2131351028, %v2237
    %v2247 = vshrl.u32 2102212464, %v2238
    %v2248 = vor.u32 %v2246, %v2247
    %v2249 = vshll.u32 2102212464, %v2237
    %v2250 = vshrl.u32 920167782, %v2238
    %v2251 = vor.u32 %v2249, %v2250
    %v2252 = vshll.u32 920167782, %v2237
    %v2253 = vshrl.u32 1326507024, %v2238
    %v2254 = vor.u32 %v2252, %v2253
    %vm2255 = vcmp.lt.s32.totalorder %v2236, 1
    %vm2256 = vcmp.lt.s32.totalorder %v2236, 2
    %vm2257 = vcmp.lt.s32.totalorder %v2236, 3
    %vm2258 = vcmp.lt.s32.totalorder %v2236, 4
    %v2259 = vsel %vm2255, %v2239, %v2242
    %v2260 = vsel %vm2258, %v2248, 2102212464
    %v2261 = vsel %vm2257, %v2245, %v2260
    %v2262 = vsel %vm2256, %v2259, %v2261
    %v2263 = vsel %vm2255, %v2242, %v2245
    %v2264 = vsel %vm2258, %v2251, 920167782
    %v2265 = vsel %vm2257, %v2248, %v2264
    %v2266 = vsel %vm2256, %v2263, %v2265
    %v2267 = vsel %vm2255, %v2245, %v2248
    %v2268 = vsel %vm2258, %v2254, 1326507024
    %v2269 = vsel %vm2257, %v2251, %v2268
    %v2270 = vsel %vm2256, %v2267, %v2269
    %v2271 = vshll.u32 %v2231, 8
    %v2272 = vmul.u32.u64.compose %v2271, %v2270
    %v2273 = vextract.low.u32 %v2272
    %v2274 = vextract.high.u32 %v2272
    %v2275 = vmul.u32.u64.compose %v2271, %v2266
    %v2276 = vextract.low.u32 %v2275
    %v2277 = vextract.high.u32 %v2275
    %v2278 = vmul.u32 %v2271, %v2262
    %v2279 = vadd.s32 %v2274, %v2276
    %vm2280 = vc.u32 %v2274, %v2276
    %v2281 = vadd.s32 %v2277, 1
    %v2282 = vsel %vm2280, %v2281, %v2277
    %v2283 = vadd.s32 %v2278, %v2282
    %v2284 = vadd.s32 %v2283, 536870912
    %v2285 = vshrl.u32 %v2284, 30
    %v2286 = vshll.u32 %v2285, 30
    %v2287 = vsub.s32 %v2283, %v2286
    %vm2288 = vcmp.lt.s32.totalorder %v2287, 0
    %v2289 = vsub.s32 0, %v2287
    %v2290 = vsel %vm2288, %v2289, %v2287
    %v2291 = vclz %v2290
    %v2292 = vsub.s32 %v2291, 2
    %vm2293 = vcmp.gt.s32.totalorder 0, %v2292
    %v2294 = vsel %vm2293, 0, %v2292
    %v2295 = vsub.s32 32, %v2294
    %v2296 = vshll.u32 %v2287, %v2294
    %v2297 = vshrl.u32 %v2279, %v2295
    %v2298 = vor.u32 %v2296, %v2297
    %v2299 = vsub.s32 4294967266, %v2294
    %v2300 = vadd.s32 %v2299, 127
    %v2301 = vshll.u32 %v2300, 23
    %v2302 = vor.u32 4788187, %v2301
    %v2303 = vand.u32 2147483647, %v2302
    %v2305 = vcvt.s32.f32 %v2298
    %v2306 = vmul.f32 %v2305, %v2303
    %v2307 = vxor.u32 %v2306, 2147483648
    %v2308 = vsel %vm2225, %v2307, %v2306
    %v2309 = vsub.s32 4, %v2285
    %v2310 = vsel %vm2225, %v2309, %v2285
    %v2311 = vsel %vm2224, %v137, %v2308
    %v2312 = vsel %vm2224, 0, %v2310
    %v2313 = vcosq.f32.pop %v2311
    %v2314 = vsinq.f32.pop %v2311
    %vm2315 = vweird.f32 %v137
    %v2316 = vadd.s32 %v2312, 3
    %v2317 = vand.u32 %v2316, 3
    %vm2318 = vcmp.lt.s32.totalorder %v2317, 2
    %vm2319 = vcmp.eq.s32.totalorder %v2317, 0
    %v2320 = vxor.u32 %v2314, 2147483648
    %v2321 = vsel %vm2319, %v2313, %v2320
    %vm2322 = vcmp.eq.s32.totalorder %v2317, 2
    %v2323 = vxor.u32 %v2313, 2147483648
    %v2324 = vsel %vm2322, %v2323, %v2314
    %v2325 = vsel %vm2318, %v2321, %v2324
    %v2326 = vsel %vm2315, nan, %v2325
    %v2327 = vand.u32 2147483647, %v138
    %vm2328 = vcmp.le.f32.partialorder %v2327, 0.7853982
    %vm2329 = vcmp.lt.s32.totalorder %v138, 0
    %v2330 = vand.u32 %v138, 2139095040
    %v2331 = vshrl.u32 %v2330, 23
    %v2332 = vsub.s32 %v2331, 127
    %v2333 = vand.u32 2147483647, %v138
    %v2334 = vand.u32 %v2333, 8388607
    %v2335 = vor.u32 %v2334, 8388608
    %v2336 = vsub.s32 0, %v2335
    %v2337 = vadd.s32 %v2332, 1
    %vm2338 = vcmp.gt.s32.totalorder %v2337, 0
    %v2339 = vsel %vm2338, %v2337, 0
    %v2340 = vshrl.u32 %v2339, 5
    %v2341 = vand.u32 %v2339, 31
    %v2342 = vsub.s32 32, %v2341
    %v2343 = vshrl.u32 683565275, %v2342
    %v2344 = vshll.u32 683565275, %v2341
    %v2345 = vshrl.u32 2475754826, %v2342
    %v2346 = vor.u32 %v2344, %v2345
    %v2347 = vshll.u32 2475754826, %v2341
    %v2348 = vshrl.u32 2131351028, %v2342
    %v2349 = vor.u32 %v2347, %v2348
    %v2350 = vshll.u32 2131351028, %v2341
    %v2351 = vshrl.u32 2102212464, %v2342
    %v2352 = vor.u32 %v2350, %v2351
    %v2353 = vshll.u32 2102212464, %v2341
    %v2354 = vshrl.u32 920167782, %v2342
    %v2355 = vor.u32 %v2353, %v2354
    %v2356 = vshll.u32 920167782, %v2341
    %v2357 = vshrl.u32 1326507024, %v2342
    %v2358 = vor.u32 %v2356, %v2357
    %vm2359 = vcmp.lt.s32.totalorder %v2340, 1
    %vm2360 = vcmp.lt.s32.totalorder %v2340, 2
    %vm2361 = vcmp.lt.s32.totalorder %v2340, 3
    %vm2362 = vcmp.lt.s32.totalorder %v2340, 4
    %v2363 = vsel %vm2359, %v2343, %v2346
    %v2364 = vsel %vm2362, %v2352, 2102212464
    %v2365 = vsel %vm2361, %v2349, %v2364
    %v2366 = vsel %vm2360, %v2363, %v2365
    %v2367 = vsel %vm2359, %v2346, %v2349
    %v2368 = vsel %vm2362, %v2355, 920167782
    %v2369 = vsel %vm2361, %v2352, %v2368
    %v2370 = vsel %vm2360, %v2367, %v2369
    %v2371 = vsel %vm2359, %v2349, %v2352
    %v2372 = vsel %vm2362, %v2358, 1326507024
    %v2373 = vsel %vm2361, %v2355, %v2372
    %v2374 = vsel %vm2360, %v2371, %v2373
    %v2375 = vshll.u32 %v2335, 8
    %v2376 = vmul.u32.u64.compose %v2375, %v2374
    %v2377 = vextract.low.u32 %v2376
    %v2378 = vextract.high.u32 %v2376
    %v2379 = vmul.u32.u64.compose %v2375, %v2370
    %v2380 = vextract.low.u32 %v2379
    %v2381 = vextract.high.u32 %v2379
    %v2382 = vmul.u32 %v2375, %v2366
    %v2383 = vadd.s32 %v2378, %v2380
    %vm2384 = vc.u32 %v2378, %v2380
    %v2385 = vadd.s32 %v2381, 1
    %v2386 = vsel %vm2384, %v2385, %v2381
    %v2387 = vadd.s32 %v2382, %v2386
    %v2388 = vadd.s32 %v2387, 536870912
    %v2389 = vshrl.u32 %v2388, 30
    %v2390 = vshll.u32 %v2389, 30
    %v2391 = vsub.s32 %v2387, %v2390
    %vm2392 = vcmp.lt.s32.totalorder %v2391, 0
    %v2393 = vsub.s32 0, %v2391
    %v2394 = vsel %vm2392, %v2393, %v2391
    %v2395 = vclz %v2394
    %v2396 = vsub.s32 %v2395, 2
    %vm2397 = vcmp.gt.s32.totalorder 0, %v2396
    %v2398 = vsel %vm2397, 0, %v2396
    %v2399 = vsub.s32 32, %v2398
    %v2400 = vshll.u32 %v2391, %v2398
    %v2401 = vshrl.u32 %v2383, %v2399
    %v2402 = vor.u32 %v2400, %v2401
    %v2403 = vsub.s32 4294967266, %v2398
    %v2404 = vadd.s32 %v2403, 127
    %v2405 = vshll.u32 %v2404, 23
    %v2406 = vor.u32 4788187, %v2405
    %v2407 = vand.u32 2147483647, %v2406
    %v2409 = vcvt.s32.f32 %v2402
    %v2410 = vmul.f32 %v2409, %v2407
    %v2411 = vxor.u32 %v2410, 2147483648
    %v2412 = vsel %vm2329, %v2411, %v2410
    %v2413 = vsub.s32 4, %v2389
    %v2414 = vsel %vm2329, %v2413, %v2389
    %v2415 = vsel %vm2328, %v138, %v2412
    %v2416 = vsel %vm2328, 0, %v2414
    %v2417 = vcosq.f32.pop %v2415
    %v2418 = vsinq.f32.pop %v2415
    %vm2419 = vweird.f32 %v138
    %v2420 = vadd.s32 %v2416, 3
    %v2421 = vand.u32 %v2420, 3
    %vm2422 = vcmp.lt.s32.totalorder %v2421, 2
    %vm2423 = vcmp.eq.s32.totalorder %v2421, 0
    %v2424 = vxor.u32 %v2418, 2147483648
    %v2425 = vsel %vm2423, %v2417, %v2424
    %vm2426 = vcmp.eq.s32.totalorder %v2421, 2
    %v2427 = vxor.u32 %v2417, 2147483648
    %v2428 = vsel %vm2426, %v2427, %v2418
    %v2429 = vsel %vm2422, %v2425, %v2428
    %v2430 = vsel %vm2419, nan, %v2429
    %v2431 = vand.u32 2147483647, %v139
    %vm2432 = vcmp.le.f32.partialorder %v2431, 0.7853982
    %vm2433 = vcmp.lt.s32.totalorder %v139, 0
    %v2434 = vand.u32 %v139, 2139095040
    %v2435 = vshrl.u32 %v2434, 23
    %v2436 = vsub.s32 %v2435, 127
    %v2437 = vand.u32 2147483647, %v139
    %v2438 = vand.u32 %v2437, 8388607
    %v2439 = vor.u32 %v2438, 8388608
    %v2440 = vsub.s32 0, %v2439
    %v2441 = vadd.s32 %v2436, 1
    %vm2442 = vcmp.gt.s32.totalorder %v2441, 0
    %v2443 = vsel %vm2442, %v2441, 0
    %v2444 = vshrl.u32 %v2443, 5
    %v2445 = vand.u32 %v2443, 31
    %v2446 = vsub.s32 32, %v2445
    %v2447 = vshrl.u32 683565275, %v2446
    %v2448 = vshll.u32 683565275, %v2445
    %v2449 = vshrl.u32 2475754826, %v2446
    %v2450 = vor.u32 %v2448, %v2449
    %v2451 = vshll.u32 2475754826, %v2445
    %v2452 = vshrl.u32 2131351028, %v2446
    %v2453 = vor.u32 %v2451, %v2452
    %v2454 = vshll.u32 2131351028, %v2445
    %v2455 = vshrl.u32 2102212464, %v2446
    %v2456 = vor.u32 %v2454, %v2455
    %v2457 = vshll.u32 2102212464, %v2445
    %v2458 = vshrl.u32 920167782, %v2446
    %v2459 = vor.u32 %v2457, %v2458
    %v2460 = vshll.u32 920167782, %v2445
    %v2461 = vshrl.u32 1326507024, %v2446
    %v2462 = vor.u32 %v2460, %v2461
    %vm2463 = vcmp.lt.s32.totalorder %v2444, 1
    %vm2464 = vcmp.lt.s32.totalorder %v2444, 2
    %vm2465 = vcmp.lt.s32.totalorder %v2444, 3
    %vm2466 = vcmp.lt.s32.totalorder %v2444, 4
    %v2467 = vsel %vm2463, %v2447, %v2450
    %v2468 = vsel %vm2466, %v2456, 2102212464
    %v2469 = vsel %vm2465, %v2453, %v2468
    %v2470 = vsel %vm2464, %v2467, %v2469
    %v2471 = vsel %vm2463, %v2450, %v2453
    %v2472 = vsel %vm2466, %v2459, 920167782
    %v2473 = vsel %vm2465, %v2456, %v2472
    %v2474 = vsel %vm2464, %v2471, %v2473
    %v2475 = vsel %vm2463, %v2453, %v2456
    %v2476 = vsel %vm2466, %v2462, 1326507024
    %v2477 = vsel %vm2465, %v2459, %v2476
    %v2478 = vsel %vm2464, %v2475, %v2477
    %v2479 = vshll.u32 %v2439, 8
    %v2480 = vmul.u32.u64.compose %v2479, %v2478
    %v2481 = vextract.low.u32 %v2480
    %v2482 = vextract.high.u32 %v2480
    %v2483 = vmul.u32.u64.compose %v2479, %v2474
    %v2484 = vextract.low.u32 %v2483
    %v2485 = vextract.high.u32 %v2483
    %v2486 = vmul.u32 %v2479, %v2470
    %v2487 = vadd.s32 %v2482, %v2484
    %vm2488 = vc.u32 %v2482, %v2484
    %v2489 = vadd.s32 %v2485, 1
    %v2490 = vsel %vm2488, %v2489, %v2485
    %v2491 = vadd.s32 %v2486, %v2490
    %v2492 = vadd.s32 %v2491, 536870912
    %v2493 = vshrl.u32 %v2492, 30
    %v2494 = vshll.u32 %v2493, 30
    %v2495 = vsub.s32 %v2491, %v2494
    %vm2496 = vcmp.lt.s32.totalorder %v2495, 0
    %v2497 = vsub.s32 0, %v2495
    %v2498 = vsel %vm2496, %v2497, %v2495
    %v2499 = vclz %v2498
    %v2500 = vsub.s32 %v2499, 2
    %vm2501 = vcmp.gt.s32.totalorder 0, %v2500
    %v2502 = vsel %vm2501, 0, %v2500
    %v2503 = vsub.s32 32, %v2502
    %v2504 = vshll.u32 %v2495, %v2502
    %v2505 = vshrl.u32 %v2487, %v2503
    %v2506 = vor.u32 %v2504, %v2505
    %v2507 = vsub.s32 4294967266, %v2502
    %v2508 = vadd.s32 %v2507, 127
    %v2509 = vshll.u32 %v2508, 23
    %v2510 = vor.u32 4788187, %v2509
    %v2511 = vand.u32 2147483647, %v2510
    %v2513 = vcvt.s32.f32 %v2506
    %v2514 = vmul.f32 %v2513, %v2511
    %v2515 = vxor.u32 %v2514, 2147483648
    %v2516 = vsel %vm2433, %v2515, %v2514
    %v2517 = vsub.s32 4, %v2493
    %v2518 = vsel %vm2433, %v2517, %v2493
    %v2519 = vsel %vm2432, %v139, %v2516
    %v2520 = vsel %vm2432, 0, %v2518
    %v2521 = vcosq.f32.pop %v2519
    %v2522 = vsinq.f32.pop %v2519
    %vm2523 = vweird.f32 %v139
    %v2524 = vadd.s32 %v2520, 3
    %v2525 = vand.u32 %v2524, 3
    %vm2526 = vcmp.lt.s32.totalorder %v2525, 2
    %vm2527 = vcmp.eq.s32.totalorder %v2525, 0
    %v2528 = vxor.u32 %v2522, 2147483648
    %v2529 = vsel %vm2527, %v2521, %v2528
    %vm2530 = vcmp.eq.s32.totalorder %v2525, 2
    %v2531 = vxor.u32 %v2521, 2147483648
    %v2532 = vsel %vm2530, %v2531, %v2522
    %v2533 = vsel %vm2526, %v2529, %v2532
    %v2534 = vsel %vm2523, nan, %v2533
    %v2535 = vand.u32 2147483647, %v140
    %vm2536 = vcmp.le.f32.partialorder %v2535, 0.7853982
    %vm2537 = vcmp.lt.s32.totalorder %v140, 0
    %v2538 = vand.u32 %v140, 2139095040
    %v2539 = vshrl.u32 %v2538, 23
    %v2540 = vsub.s32 %v2539, 127
    %v2541 = vand.u32 2147483647, %v140
    %v2542 = vand.u32 %v2541, 8388607
    %v2543 = vor.u32 %v2542, 8388608
    %v2544 = vsub.s32 0, %v2543
    %v2545 = vadd.s32 %v2540, 1
    %vm2546 = vcmp.gt.s32.totalorder %v2545, 0
    %v2547 = vsel %vm2546, %v2545, 0
    %v2548 = vshrl.u32 %v2547, 5
    %v2549 = vand.u32 %v2547, 31
    %v2550 = vsub.s32 32, %v2549
    %v2551 = vshrl.u32 683565275, %v2550
    %v2552 = vshll.u32 683565275, %v2549
    %v2553 = vshrl.u32 2475754826, %v2550
    %v2554 = vor.u32 %v2552, %v2553
    %v2555 = vshll.u32 2475754826, %v2549
    %v2556 = vshrl.u32 2131351028, %v2550
    %v2557 = vor.u32 %v2555, %v2556
    %v2558 = vshll.u32 2131351028, %v2549
    %v2559 = vshrl.u32 2102212464, %v2550
    %v2560 = vor.u32 %v2558, %v2559
    %v2561 = vshll.u32 2102212464, %v2549
    %v2562 = vshrl.u32 920167782, %v2550
    %v2563 = vor.u32 %v2561, %v2562
    %v2564 = vshll.u32 920167782, %v2549
    %v2565 = vshrl.u32 1326507024, %v2550
    %v2566 = vor.u32 %v2564, %v2565
    %vm2567 = vcmp.lt.s32.totalorder %v2548, 1
    %vm2568 = vcmp.lt.s32.totalorder %v2548, 2
    %vm2569 = vcmp.lt.s32.totalorder %v2548, 3
    %vm2570 = vcmp.lt.s32.totalorder %v2548, 4
    %v2571 = vsel %vm2567, %v2551, %v2554
    %v2572 = vsel %vm2570, %v2560, 2102212464
    %v2573 = vsel %vm2569, %v2557, %v2572
    %v2574 = vsel %vm2568, %v2571, %v2573
    %v2575 = vsel %vm2567, %v2554, %v2557
    %v2576 = vsel %vm2570, %v2563, 920167782
    %v2577 = vsel %vm2569, %v2560, %v2576
    %v2578 = vsel %vm2568, %v2575, %v2577
    %v2579 = vsel %vm2567, %v2557, %v2560
    %v2580 = vsel %vm2570, %v2566, 1326507024
    %v2581 = vsel %vm2569, %v2563, %v2580
    %v2582 = vsel %vm2568, %v2579, %v2581
    %v2583 = vshll.u32 %v2543, 8
    %v2584 = vmul.u32.u64.compose %v2583, %v2582
    %v2585 = vextract.low.u32 %v2584
    %v2586 = vextract.high.u32 %v2584
    %v2587 = vmul.u32.u64.compose %v2583, %v2578
    %v2588 = vextract.low.u32 %v2587
    %v2589 = vextract.high.u32 %v2587
    %v2590 = vmul.u32 %v2583, %v2574
    %v2591 = vadd.s32 %v2586, %v2588
    %vm2592 = vc.u32 %v2586, %v2588
    %v2593 = vadd.s32 %v2589, 1
    %v2594 = vsel %vm2592, %v2593, %v2589
    %v2595 = vadd.s32 %v2590, %v2594
    %v2596 = vadd.s32 %v2595, 536870912
    %v2597 = vshrl.u32 %v2596, 30
    %v2598 = vshll.u32 %v2597, 30
    %v2599 = vsub.s32 %v2595, %v2598
    %vm2600 = vcmp.lt.s32.totalorder %v2599, 0
    %v2601 = vsub.s32 0, %v2599
    %v2602 = vsel %vm2600, %v2601, %v2599
    %v2603 = vclz %v2602
    %v2604 = vsub.s32 %v2603, 2
    %vm2605 = vcmp.gt.s32.totalorder 0, %v2604
    %v2606 = vsel %vm2605, 0, %v2604
    %v2607 = vsub.s32 32, %v2606
    %v2608 = vshll.u32 %v2599, %v2606
    %v2609 = vshrl.u32 %v2591, %v2607
    %v2610 = vor.u32 %v2608, %v2609
    %v2611 = vsub.s32 4294967266, %v2606
    %v2612 = vadd.s32 %v2611, 127
    %v2613 = vshll.u32 %v2612, 23
    %v2614 = vor.u32 4788187, %v2613
    %v2615 = vand.u32 2147483647, %v2614
    %v2617 = vcvt.s32.f32 %v2610
    %v2618 = vmul.f32 %v2617, %v2615
    %v2619 = vxor.u32 %v2618, 2147483648
    %v2620 = vsel %vm2537, %v2619, %v2618
    %v2621 = vsub.s32 4, %v2597
    %v2622 = vsel %vm2537, %v2621, %v2597
    %v2623 = vsel %vm2536, %v140, %v2620
    %v2624 = vsel %vm2536, 0, %v2622
    %v2625 = vcosq.f32.pop %v2623
    %v2626 = vsinq.f32.pop %v2623
    %vm2627 = vweird.f32 %v140
    %v2628 = vadd.s32 %v2624, 3
    %v2629 = vand.u32 %v2628, 3
    %vm2630 = vcmp.lt.s32.totalorder %v2629, 2
    %vm2631 = vcmp.eq.s32.totalorder %v2629, 0
    %v2632 = vxor.u32 %v2626, 2147483648
    %v2633 = vsel %vm2631, %v2625, %v2632
    %vm2634 = vcmp.eq.s32.totalorder %v2629, 2
    %v2635 = vxor.u32 %v2625, 2147483648
    %v2636 = vsel %vm2634, %v2635, %v2626
    %v2637 = vsel %vm2630, %v2633, %v2636
    %v2638 = vsel %vm2627, nan, %v2637
    %v2639 = vand.u32 2147483647, %v141
    %vm2640 = vcmp.le.f32.partialorder %v2639, 0.7853982
    %vm2641 = vcmp.lt.s32.totalorder %v141, 0
    %v2642 = vand.u32 %v141, 2139095040
    %v2643 = vshrl.u32 %v2642, 23
    %v2644 = vsub.s32 %v2643, 127
    %v2645 = vand.u32 2147483647, %v141
    %v2646 = vand.u32 %v2645, 8388607
    %v2647 = vor.u32 %v2646, 8388608
    %v2648 = vsub.s32 0, %v2647
    %v2649 = vadd.s32 %v2644, 1
    %vm2650 = vcmp.gt.s32.totalorder %v2649, 0
    %v2651 = vsel %vm2650, %v2649, 0
    %v2652 = vshrl.u32 %v2651, 5
    %v2653 = vand.u32 %v2651, 31
    %v2654 = vsub.s32 32, %v2653
    %v2655 = vshrl.u32 683565275, %v2654
    %v2656 = vshll.u32 683565275, %v2653
    %v2657 = vshrl.u32 2475754826, %v2654
    %v2658 = vor.u32 %v2656, %v2657
    %v2659 = vshll.u32 2475754826, %v2653
    %v2660 = vshrl.u32 2131351028, %v2654
    %v2661 = vor.u32 %v2659, %v2660
    %v2662 = vshll.u32 2131351028, %v2653
    %v2663 = vshrl.u32 2102212464, %v2654
    %v2664 = vor.u32 %v2662, %v2663
    %v2665 = vshll.u32 2102212464, %v2653
    %v2666 = vshrl.u32 920167782, %v2654
    %v2667 = vor.u32 %v2665, %v2666
    %v2668 = vshll.u32 920167782, %v2653
    %v2669 = vshrl.u32 1326507024, %v2654
    %v2670 = vor.u32 %v2668, %v2669
    %vm2671 = vcmp.lt.s32.totalorder %v2652, 1
    %vm2672 = vcmp.lt.s32.totalorder %v2652, 2
    %vm2673 = vcmp.lt.s32.totalorder %v2652, 3
    %vm2674 = vcmp.lt.s32.totalorder %v2652, 4
    %v2675 = vsel %vm2671, %v2655, %v2658
    %v2676 = vsel %vm2674, %v2664, 2102212464
    %v2677 = vsel %vm2673, %v2661, %v2676
    %v2678 = vsel %vm2672, %v2675, %v2677
    %v2679 = vsel %vm2671, %v2658, %v2661
    %v2680 = vsel %vm2674, %v2667, 920167782
    %v2681 = vsel %vm2673, %v2664, %v2680
    %v2682 = vsel %vm2672, %v2679, %v2681
    %v2683 = vsel %vm2671, %v2661, %v2664
    %v2684 = vsel %vm2674, %v2670, 1326507024
    %v2685 = vsel %vm2673, %v2667, %v2684
    %v2686 = vsel %vm2672, %v2683, %v2685
    %v2687 = vshll.u32 %v2647, 8
    %v2688 = vmul.u32.u64.compose %v2687, %v2686
    %v2689 = vextract.low.u32 %v2688
    %v2690 = vextract.high.u32 %v2688
    %v2691 = vmul.u32.u64.compose %v2687, %v2682
    %v2692 = vextract.low.u32 %v2691
    %v2693 = vextract.high.u32 %v2691
    %v2694 = vmul.u32 %v2687, %v2678
    %v2695 = vadd.s32 %v2690, %v2692
    %vm2696 = vc.u32 %v2690, %v2692
    %v2697 = vadd.s32 %v2693, 1
    %v2698 = vsel %vm2696, %v2697, %v2693
    %v2699 = vadd.s32 %v2694, %v2698
    %v2700 = vadd.s32 %v2699, 536870912
    %v2701 = vshrl.u32 %v2700, 30
    %v2702 = vshll.u32 %v2701, 30
    %v2703 = vsub.s32 %v2699, %v2702
    %vm2704 = vcmp.lt.s32.totalorder %v2703, 0
    %v2705 = vsub.s32 0, %v2703
    %v2706 = vsel %vm2704, %v2705, %v2703
    %v2707 = vclz %v2706
    %v2708 = vsub.s32 %v2707, 2
    %vm2709 = vcmp.gt.s32.totalorder 0, %v2708
    %v2710 = vsel %vm2709, 0, %v2708
    %v2711 = vsub.s32 32, %v2710
    %v2712 = vshll.u32 %v2703, %v2710
    %v2713 = vshrl.u32 %v2695, %v2711
    %v2714 = vor.u32 %v2712, %v2713
    %v2715 = vsub.s32 4294967266, %v2710
    %v2716 = vadd.s32 %v2715, 127
    %v2717 = vshll.u32 %v2716, 23
    %v2718 = vor.u32 4788187, %v2717
    %v2719 = vand.u32 2147483647, %v2718
    %v2721 = vcvt.s32.f32 %v2714
    %v2722 = vmul.f32 %v2721, %v2719
    %v2723 = vxor.u32 %v2722, 2147483648
    %v2724 = vsel %vm2641, %v2723, %v2722
    %v2725 = vsub.s32 4, %v2701
    %v2726 = vsel %vm2641, %v2725, %v2701
    %v2727 = vsel %vm2640, %v141, %v2724
    %v2728 = vsel %vm2640, 0, %v2726
    %v2729 = vcosq.f32.pop %v2727
    %v2730 = vsinq.f32.pop %v2727
    %vm2731 = vweird.f32 %v141
    %v2732 = vadd.s32 %v2728, 3
    %v2733 = vand.u32 %v2732, 3
    %vm2734 = vcmp.lt.s32.totalorder %v2733, 2
    %vm2735 = vcmp.eq.s32.totalorder %v2733, 0
    %v2736 = vxor.u32 %v2730, 2147483648
    %v2737 = vsel %vm2735, %v2729, %v2736
    %vm2738 = vcmp.eq.s32.totalorder %v2733, 2
    %v2739 = vxor.u32 %v2729, 2147483648
    %v2740 = vsel %vm2738, %v2739, %v2730
    %v2741 = vsel %vm2734, %v2737, %v2740
    %v2742 = vsel %vm2731, nan, %v2741
    %v2743 = vand.u32 2147483647, %v142
    %vm2744 = vcmp.le.f32.partialorder %v2743, 0.7853982
    %vm2745 = vcmp.lt.s32.totalorder %v142, 0
    %v2746 = vand.u32 %v142, 2139095040
    %v2747 = vshrl.u32 %v2746, 23
    %v2748 = vsub.s32 %v2747, 127
    %v2749 = vand.u32 2147483647, %v142
    %v2750 = vand.u32 %v2749, 8388607
    %v2751 = vor.u32 %v2750, 8388608
    %v2752 = vsub.s32 0, %v2751
    %v2753 = vadd.s32 %v2748, 1
    %vm2754 = vcmp.gt.s32.totalorder %v2753, 0
    %v2755 = vsel %vm2754, %v2753, 0
    %v2756 = vshrl.u32 %v2755, 5
    %v2757 = vand.u32 %v2755, 31
    %v2758 = vsub.s32 32, %v2757
    %v2759 = vshrl.u32 683565275, %v2758
    %v2760 = vshll.u32 683565275, %v2757
    %v2761 = vshrl.u32 2475754826, %v2758
    %v2762 = vor.u32 %v2760, %v2761
    %v2763 = vshll.u32 2475754826, %v2757
    %v2764 = vshrl.u32 2131351028, %v2758
    %v2765 = vor.u32 %v2763, %v2764
    %v2766 = vshll.u32 2131351028, %v2757
    %v2767 = vshrl.u32 2102212464, %v2758
    %v2768 = vor.u32 %v2766, %v2767
    %v2769 = vshll.u32 2102212464, %v2757
    %v2770 = vshrl.u32 920167782, %v2758
    %v2771 = vor.u32 %v2769, %v2770
    %v2772 = vshll.u32 920167782, %v2757
    %v2773 = vshrl.u32 1326507024, %v2758
    %v2774 = vor.u32 %v2772, %v2773
    %vm2775 = vcmp.lt.s32.totalorder %v2756, 1
    %vm2776 = vcmp.lt.s32.totalorder %v2756, 2
    %vm2777 = vcmp.lt.s32.totalorder %v2756, 3
    %vm2778 = vcmp.lt.s32.totalorder %v2756, 4
    %v2779 = vsel %vm2775, %v2759, %v2762
    %v2780 = vsel %vm2778, %v2768, 2102212464
    %v2781 = vsel %vm2777, %v2765, %v2780
    %v2782 = vsel %vm2776, %v2779, %v2781
    %v2783 = vsel %vm2775, %v2762, %v2765
    %v2784 = vsel %vm2778, %v2771, 920167782
    %v2785 = vsel %vm2777, %v2768, %v2784
    %v2786 = vsel %vm2776, %v2783, %v2785
    %v2787 = vsel %vm2775, %v2765, %v2768
    %v2788 = vsel %vm2778, %v2774, 1326507024
    %v2789 = vsel %vm2777, %v2771, %v2788
    %v2790 = vsel %vm2776, %v2787, %v2789
    %v2791 = vshll.u32 %v2751, 8
    %v2792 = vmul.u32.u64.compose %v2791, %v2790
    %v2793 = vextract.low.u32 %v2792
    %v2794 = vextract.high.u32 %v2792
    %v2795 = vmul.u32.u64.compose %v2791, %v2786
    %v2796 = vextract.low.u32 %v2795
    %v2797 = vextract.high.u32 %v2795
    %v2798 = vmul.u32 %v2791, %v2782
    %v2799 = vadd.s32 %v2794, %v2796
    %vm2800 = vc.u32 %v2794, %v2796
    %v2801 = vadd.s32 %v2797, 1
    %v2802 = vsel %vm2800, %v2801, %v2797
    %v2803 = vadd.s32 %v2798, %v2802
    %v2804 = vadd.s32 %v2803, 536870912
    %v2805 = vshrl.u32 %v2804, 30
    %v2806 = vshll.u32 %v2805, 30
    %v2807 = vsub.s32 %v2803, %v2806
    %vm2808 = vcmp.lt.s32.totalorder %v2807, 0
    %v2809 = vsub.s32 0, %v2807
    %v2810 = vsel %vm2808, %v2809, %v2807
    %v2811 = vclz %v2810
    %v2812 = vsub.s32 %v2811, 2
    %vm2813 = vcmp.gt.s32.totalorder 0, %v2812
    %v2814 = vsel %vm2813, 0, %v2812
    %v2815 = vsub.s32 32, %v2814
    %v2816 = vshll.u32 %v2807, %v2814
    %v2817 = vshrl.u32 %v2799, %v2815
    %v2818 = vor.u32 %v2816, %v2817
    %v2819 = vsub.s32 4294967266, %v2814
    %v2820 = vadd.s32 %v2819, 127
    %v2821 = vshll.u32 %v2820, 23
    %v2822 = vor.u32 4788187, %v2821
    %v2823 = vand.u32 2147483647, %v2822
    %v2825 = vcvt.s32.f32 %v2818
    %v2826 = vmul.f32 %v2825, %v2823
    %v2827 = vxor.u32 %v2826, 2147483648
    %v2828 = vsel %vm2745, %v2827, %v2826
    %v2829 = vsub.s32 4, %v2805
    %v2830 = vsel %vm2745, %v2829, %v2805
    %v2831 = vsel %vm2744, %v142, %v2828
    %v2832 = vsel %vm2744, 0, %v2830
    %v2833 = vcosq.f32.pop %v2831
    %v2834 = vsinq.f32.pop %v2831
    %vm2835 = vweird.f32 %v142
    %v2836 = vadd.s32 %v2832, 3
    %v2837 = vand.u32 %v2836, 3
    %vm2838 = vcmp.lt.s32.totalorder %v2837, 2
    %vm2839 = vcmp.eq.s32.totalorder %v2837, 0
    %v2840 = vxor.u32 %v2834, 2147483648
    %v2841 = vsel %vm2839, %v2833, %v2840
    %vm2842 = vcmp.eq.s32.totalorder %v2837, 2
    %v2843 = vxor.u32 %v2833, 2147483648
    %v2844 = vsel %vm2842, %v2843, %v2834
    %v2845 = vsel %vm2838, %v2841, %v2844
    %v2846 = vsel %vm2835, nan, %v2845
    %2847 = vst [vmem:[#allocation5] sm:$0xff] %v246
    %2848 = vst [vmem:[#allocation5 + $0x8] sm:$0xff] %v350
    %2849 = vst [vmem:[#allocation5 + $0x10] sm:$0xff] %v454
    %2850 = vst [vmem:[#allocation5 + $0x18] sm:$0xff] %v558
    %2851 = vst [vmem:[#allocation5 + $0x20] sm:$0xff] %v662
    %2852 = vst [vmem:[#allocation5 + $0x28] sm:$0xff] %v766
    %2853 = vst [vmem:[#allocation5 + $0x30] sm:$0xff] %v870
    %2854 = vst [vmem:[#allocation5 + $0x38] sm:$0xff] %v974
    %2855 = vst [vmem:[#allocation5 + $0x40] sm:$0xff] %v1078
    %2856 = vst [vmem:[#allocation5 + $0x48] sm:$0xff] %v1182
    %2857 = vst [vmem:[#allocation5 + $0x50] sm:$0xff] %v1286
    %2858 = vst [vmem:[#allocation5 + $0x58] sm:$0xff] %v1390
    %2859 = vst [vmem:[#allocation5 + $0x60] sm:$0xff] %v1494
    %2860 = vst [vmem:[#allocation5 + $0x68] sm:$0xff] %v1598
    %2861 = vst [vmem:[#allocation5 + $0x70] sm:$0xff] %v1702
    %2862 = vst [vmem:[#allocation5 + $0x78] sm:$0xff] %v1806
    %2863 = vst [vmem:[#allocation5 + $0x80] sm:$0xff] %v1910
    %2864 = vst [vmem:[#allocation5 + $0x88] sm:$0xff] %v2014
    %2865 = vst [vmem:[#allocation5 + $0x90] sm:$0xff] %v2118
    %2866 = vst [vmem:[#allocation5 + $0x98] sm:$0xff] %v2222
    %2867 = vst [vmem:[#allocation5 + $0xa0] sm:$0xff] %v2326
    %2868 = vst [vmem:[#allocation5 + $0xa8] sm:$0xff] %v2430
    %2869 = vst [vmem:[#allocation5 + $0xb0] sm:$0xff] %v2534
    %2870 = vst [vmem:[#allocation5 + $0xb8] sm:$0xff] %v2638
    %2871 = vst [vmem:[#allocation5 + $0xc0] sm:$0xff] %v2742
    %2872 = vst [vmem:[#allocation5 + $0xc8] sm:$0xff] %v2846
    // Predicated region
    $region10: #{tpu_custom_call.1} parent=1 // pred_check
      _
    $region11: #{tpu_custom_call.1} parent=1 // pred_check_branch
      %2874 = sbr.rel (0) target = $region13
    $region12: #{tpu_custom_call.1} parent=1 // pred_region
      %s2876 = ssub.s32 3328, 3328
      %2877 = vsyncadd [#allocation4], %s2876
      %s2878 = sshll.u32 [#allocation5], 4
      %s2879 = int_to_ptr.vmem [resolvable:$true] %s2878
      %2884 = dma.vmem_to_hbm [thread:$0]  %s2879, 3328, %s1, [#allocation4], 256, 256, 16
    $region13: #{tpu_custom_call.1} parent=1 // pred_fallthru
      _
    // Predicated region
    $region14: #{tpu_custom_call.1} parent=1 // pred_check
      _
    $region15: #{tpu_custom_call.1} parent=1 // pred_check_branch
      %2886 = sbr.rel (0) target = $region17
    $region16: #{tpu_custom_call.1} parent=1 // pred_region
      %2887 = dma.done [#allocation4], 3328
    $region17: #{tpu_custom_call.1} parent=1 // pred_fallthru
      _
    %2888 = vsyncpa [#allocation3], 1
    %2889 = vsyncpa [#allocation4], 1

</llo_original>
